<compile_context>
chip_gen: v5e
topology: v5e:2x2
jax: 0.10.0
libtpu: 0.0.40
codegen_flags: <defaults>
</compile_context>

<pallas_src>
from functools import partial

import numpy as np

import jax
import jax.numpy as jnp
from jax.experimental import pallas as pl
from jax.experimental.pallas import tpu as pltpu

DIM = 128          # feature dimension
K_QUEUE = 124      # queue size (small synthetic value; B + 2K = 256)
MOMENTUM = 0.999
TEMP = 0.07


# ==========================================================================
# Kernel A: fused  [EMA of key params]  +  [q / k encoders + normalize]
#           +  [queue enqueue (dynamic row scatter)]  +  [all_feature slab]
# ==========================================================================
def _fused_encoder_kernel(rows_ref,                       # SMEM (2, B) int32
                          xq_ref, xk_ref,                 # (B, in_dim) f32
                          wq_ref, wk_ref,                 # (in_dim, dim) f32
                          bq_ref, bk_ref,                 # (1, dim) f32
                          baq_ref, nbq_ref,               # (K, dim) f32
                          wk_out_ref, bk_out_ref,         # (in_dim, dim), (1, dim)
                          baq_out_ref, nbq_out_ref,       # (K, dim)
                          feat_out_ref,                   # (B + 2K, dim)
                          *, m, b, k_queue):
    # ---- momentum EMA of the key-encoder parameters (f32 master copy) ----
    wk_out_ref[...] = m * wk_ref[...] + (1.0 - m) * wq_ref[...]
    bk_out_ref[...] = m * bk_ref[...] + (1.0 - m) * bq_ref[...]

    # ---- q = F.normalize(x_q @ W_q + b_q, dim=1) ----
    fq = jnp.dot(xq_ref[...], wq_ref[...],
                 preferred_element_type=jnp.float32) + bq_ref[...]
    q = fq * jax.lax.rsqrt(
        jnp.maximum(jnp.sum(fq * fq, axis=1, keepdims=True), 1e-24))

    # ---- k = F.normalize(x_k @ W_k_new + b_k_new, dim=1)  (updated params) ----
    fk = jnp.dot(xk_ref[...], wk_out_ref[...],
                 preferred_element_type=jnp.float32) + bk_out_ref[...]
    k = fk * jax.lax.rsqrt(
        jnp.maximum(jnp.sum(fk * fk, axis=1, keepdims=True), 1e-24))

    # ---- enqueue k rows into the class queues (data-dependent row scatter) --
    baq_out_ref[...] = baq_ref[...]
    nbq_out_ref[...] = nbq_ref[...]
    for i in range(b):                       # b is small & static -> unrolled
        row_ba = rows_ref[0, i]              # destination row, or k_queue = skip
        row_nb = rows_ref[1, i]
        k_row = k[i:i + 1, :]                # static (1, dim) slice

        @pl.when(row_ba < k_queue)
        def _():
            baq_out_ref[pl.ds(row_ba, 1), :] = k_row

        @pl.when(row_nb < k_queue)
        def _():
            nbq_out_ref[pl.ds(row_nb, 1), :] = k_row

    # ---- all_feature = [q ; ba_queue_new ; nonba_queue_new] ----
    feat_out_ref[0:b, :] = q
    feat_out_ref[b:b + k_queue, :] = baq_out_ref[...]
    feat_out_ref[b + k_queue:b + 2 * k_queue, :] = nbq_out_ref[...]


def fused_encoder_update_enqueue(rows, x_q, x_k, w_q, w_k, b_q, b_k,
                                 ba_queue, nonba_queue, *, m, K):
    B, in_dim = x_q.shape
    dim = w_q.shape[1]
    N = B + 2 * K

    def fullspec(shape):
        return pl.BlockSpec(shape, lambda i, rows_ref, _s=shape: (0,) * len(_s))

    kernel = partial(_fused_encoder_kernel, m=float(m), b=B, k_queue=K)
    out_shape = (
        jax.ShapeDtypeStruct((in_dim, dim), jnp.float32),   # w_k_new
        jax.ShapeDtypeStruct((1, dim), jnp.float32),        # b_k_new
        jax.ShapeDtypeStruct((K, dim), jnp.float32),        # ba_queue_new
        jax.ShapeDtypeStruct((K, dim), jnp.float32),        # nonba_queue_new
        jax.ShapeDtypeStruct((N, dim), jnp.float32),        # all_feature
    )
    return pl.pallas_call(
        kernel,
        out_shape=out_shape,
        grid_spec=pltpu.PrefetchScalarGridSpec(
            num_scalar_prefetch=1,
            grid=(1,),
            in_specs=[fullspec((B, in_dim)), fullspec((B, in_dim)),
                      fullspec((in_dim, dim)), fullspec((in_dim, dim)),
                      fullspec((1, dim)), fullspec((1, dim)),
                      fullspec((K, dim)), fullspec((K, dim))],
            out_specs=(fullspec((in_dim, dim)), fullspec((1, dim)),
                       fullspec((K, dim)), fullspec((K, dim)),
                       fullspec((N, dim))),
        ),
        compiler_params=pltpu.CompilerParams(
            dimension_semantics=("arbitrary",)),
    )(rows, x_q, x_k, w_q, w_k, b_q, b_k, ba_queue, nonba_queue)


# ==========================================================================
# Kernel B: supervised-contrastive per-row loss.
#   sim[c, r] = <f_c, f_r> / T  (columns on sublanes, query rows on lanes)
#   loss_r = log(sum_c exp(sim[c,r]) * not_diag) - mean_{pos c} sim[c, r]
# Row-max subtraction of the reference is shift-invariant and dropped
# (|sim| <= ~1/T since features are L2-normalized -> exp is safe in f32).
# ==========================================================================
def _labels_from_index(idx, tgt_ref, b, k_queue):
    # label(j) = targets[j] for j < b, 1 for the ba-queue rows, 0 for nonba rows
    lab = jnp.logical_and(idx >= b, idx < b + k_queue).astype(jnp.int32)
    for j in range(b):
        lab = jnp.where(idx == j, tgt_ref[j], lab)
    return lab


def _supcon_kernel(tgt_ref, feat_all_ref, feat_row_ref, out_ref,
                   *, tr, n, b, k_queue, inv_t):
    i = pl.program_id(0)

    # (n, tr) = all-features (columns) x row-tile, contracting D with D (NT form)
    sim = jax.lax.dot_general(
        feat_all_ref[...], feat_row_ref[...],
        dimension_numbers=(((1,), (1,)), ((), ())),
        preferred_element_type=jnp.float32) * inv_t

    col_id = jax.lax.broadcasted_iota(jnp.int32, (n, 1), 0)            # global col
    row_id = jax.lax.broadcasted_iota(jnp.int32, (1, tr), 1) + i * tr  # global row

    lab_c = _labels_from_index(col_id, tgt_ref, b, k_queue)            # (n, 1)
    lab_r = _labels_from_index(row_id, tgt_ref, b, k_queue)            # (1, tr)

    not_diag = col_id != row_id                                        # (n, tr)
    pos = jnp.logical_and(lab_c == lab_r, not_diag)                    # (n, tr)

    e = jnp.where(not_diag, jnp.exp(sim), 0.0)
    denom = jnp.sum(e, axis=0, keepdims=True)                          # (1, tr)
    cnt = jnp.sum(pos.astype(jnp.float32), axis=0, keepdims=True)      # (1, tr)
    s = jnp.sum(jnp.where(pos, sim, 0.0), axis=0, keepdims=True)       # (1, tr)

    # TODO(synk): no cnt==0 guard (matches torch; impossible here because each
    # class queue always contributes at least one positive per row).
    out_ref[...] = jnp.log(denom) - s * pl.reciprocal(cnt, approx=True)


def _supcon_row_tile(n):
    """2-way row split only on multi-TensorCore parts (v7x); 1 step otherwise."""
    kind = ""
    try:
        kind = jax.devices()[0].device_kind.lower()
    except Exception:
        pass
    if ("v7" in kind or "tpu7" in kind) and n % 2 == 0 and (n // 2) % 8 == 0:
        return n // 2
    return n


def supcon_per_row_loss(all_feature, targets, temperature, *, batch, K):
    N, D = all_feature.shape
    tr = _supcon_row_tile(N)
    assert N % tr == 0
    kernel = partial(_supcon_kernel, tr=tr, n=N, b=batch, k_queue=K,
                     inv_t=float(1.0 / temperature))
    return pl.pallas_call(
        kernel,
        out_shape=jax.ShapeDtypeStruct((1, N), jnp.float32),
        grid_spec=pltpu.PrefetchScalarGridSpec(
            num_scalar_prefetch=1,
            grid=(N // tr,),
            in_specs=[
                pl.BlockSpec((N, D), lambda i, tgt: (0, 0)),    # all features (cols)
                pl.BlockSpec((tr, D), lambda i, tgt: (i, 0)),   # row tile
            ],
            out_specs=pl.BlockSpec((1, tr), lambda i, tgt: (0, i)),
        ),
        compiler_params=pltpu.CompilerParams(
            dimension_semantics=("parallel",)),
    )(targets.astype(jnp.int32), all_feature, all_feature)


# ==========================================================================
# Full forward (pure-functional; queues/pointers returned as new state)
# ==========================================================================
def bal_sup_moco_forward(params_q, params_k, state, im_q, im_k, targets,
                         *, K=K_QUEUE, m=MOMENTUM, T=TEMP):
    B = im_q.shape[0]

    # enqueue destination rows (tiny scalar math; fed to SMEM scalar prefetch)
    is_ba = targets == 1
    is_nonba = targets == 0
    rank_ba = jnp.cumsum(is_ba.astype(jnp.int32)) - 1
    rank_nb = jnp.cumsum(is_nonba.astype(jnp.int32)) - 1
    ba_rows = jnp.where(is_ba, (state["ba_ptr"] + rank_ba) % K, K)      # K = skip
    nb_rows = jnp.where(is_nonba, (state["nonba_ptr"] + rank_nb) % K, K)
    rows = jnp.stack([ba_rows, nb_rows]).astype(jnp.int32)              # (2, B)

    x_q = im_q.reshape(B, -1).astype(jnp.float32)
    x_k = im_k.reshape(B, -1).astype(jnp.float32)

    (wk_new, bk_new, ba_queue, nonba_queue, all_feature) = (
        fused_encoder_update_enqueue(
            rows, x_q, x_k,
            params_q["w"], params_k["w"], params_q["b"], params_k["b"],
            state["ba_queue"], state["nonba_queue"], m=m, K=K))

    per_row = supcon_per_row_loss(all_feature, targets, T, batch=B, K=K)
    loss = jnp.mean(per_row)

    new_params_k = {"w": wk_new, "b": bk_new}
    new_state = dict(
        ba_queue=ba_queue, nonba_queue=nonba_queue,
        ba_ptr=(state["ba_ptr"] + jnp.sum(is_ba.astype(jnp.int32))) % K,
        nonba_ptr=(state["nonba_ptr"] + jnp.sum(is_nonba.astype(jnp.int32))) % K)
    aux = dict(all_feature=all_feature)
    return loss, new_params_k, new_state, aux


# ==========================================================================
# Pure-JAX reference of the loss path (correctness cross-check)
# ==========================================================================
def reference_loss(all_feature, all_label, T):
    N = all_feature.shape[0]
    sim = all_feature @ all_feature.T / T
    logits = sim - jnp.max(sim, axis=1, keepdims=True)
    lab = all_label.reshape(-1, 1)
    mask = (lab == lab.T).astype(jnp.float32)
    logits_mask = 1.0 - jnp.eye(N, dtype=jnp.float32)
    mask = mask * logits_mask
    exp_logits = jnp.exp(logits) * logits_mask
    log_prob = logits - jnp.log(jnp.sum(exp_logits, axis=1, keepdims=True))
    mean_log_prob_pos = jnp.sum(mask * log_prob, 1) / jnp.sum(mask, 1)
    return -jnp.mean(mean_log_prob_pos)


if __name__ == "__main__":
    key = jax.random.PRNGKey(0)
    B, C, H, W = 8, 4, 16, 16
    in_dim = C * H * W
    k1, k2, k3, k4, k5, k6 = jax.random.split(key, 6)

    # deterministic synthetic encoder params; encoder_k starts as a copy of q
    w_q = 0.02 * jax.random.normal(k1, (in_dim, DIM), jnp.float32)
    b_q = jnp.zeros((1, DIM), jnp.float32)
    params_q = {"w": w_q, "b": b_q}
    params_k = {"w": w_q, "b": b_q}

    # queues: randn(K, dim) normalized along dim=0 (as in the module __init__)
    ba_q0 = jax.random.normal(k2, (K_QUEUE, DIM), jnp.float32)
    nonba_q0 = jax.random.normal(k3, (K_QUEUE, DIM), jnp.float32)
    ba_q0 = ba_q0 / jnp.maximum(
        jnp.linalg.norm(ba_q0, axis=0, keepdims=True), 1e-12)
    nonba_q0 = nonba_q0 / jnp.maximum(
        jnp.linalg.norm(nonba_q0, axis=0, keepdims=True), 1e-12)
    state = dict(ba_queue=ba_q0, nonba_queue=nonba_q0,
                 ba_ptr=jnp.int32(0), nonba_ptr=jnp.int32(0))

    im_q = jax.random.normal(k4, (B, C, H, W), jnp.float32)
    im_k = jax.random.normal(k5, (B, C, H, W), jnp.float32)
    targets = jax.random.randint(k6, (B,), 0, 2, jnp.int32)

    loss, new_params_k, new_state, aux = bal_sup_moco_forward(
        params_q, params_k, state, im_q, im_k, targets)
    loss = jax.block_until_ready(loss)

    # ---- loss cross-check against the pure-JAX reference ----
    all_label = jnp.concatenate([targets.astype(jnp.float32),
                                 jnp.ones((K_QUEUE,), jnp.float32),
                                 jnp.zeros((K_QUEUE,), jnp.float32)])
    ref = jax.block_until_ready(
        reference_loss(aux["all_feature"], all_label, TEMP))
    assert jnp.isfinite(loss), "loss is not finite"
    assert jnp.allclose(loss, ref, rtol=1e-3, atol=1e-3), (loss, ref)

    # ---- structural checks of the in-kernel enqueue / slab assembly ----
    af = np.asarray(jax.device_get(aux["all_feature"]))
    new_ba = np.asarray(jax.device_get(new_state["ba_queue"]))
    new_nb = np.asarray(jax.device_get(new_state["nonba_queue"]))
    assert np.array_equal(af[B:B + K_QUEUE], new_ba)
    assert np.array_equal(af[B + K_QUEUE:], new_nb)
    assert np.allclose(np.linalg.norm(af[:B], axis=1), 1.0, atol=1e-4)
    t_np = np.asarray(jax.device_get(targets))
    changed_ba = np.where(np.any(new_ba != np.asarray(jax.device_get(ba_q0)),
                                 axis=1))[0].tolist()
    changed_nb = np.where(np.any(new_nb != np.asarray(jax.device_get(nonba_q0)),
                                 axis=1))[0].tolist()
    assert sorted(changed_ba) == list(range(int((t_np == 1).sum()))), changed_ba
    assert sorted(changed_nb) == list(range(int((t_np == 0).sum()))), changed_nb

    print("KERNEL_OK")
</pallas_src>

<mosaic_0001>
module attributes {stable_mosaic.version = 11 : i64} {
  func.func @_fused_encoder_kernel(%arg0: i32, %arg1: memref<2x8xi32, #tpu.memory_space<smem>>, %arg2: memref<8x1024xf32, #tpu.memory_space<vmem>>, %arg3: memref<8x1024xf32, #tpu.memory_space<vmem>>, %arg4: memref<1024x128xf32, #tpu.memory_space<vmem>>, %arg5: memref<1024x128xf32, #tpu.memory_space<vmem>>, %arg6: memref<1x128xf32, #tpu.memory_space<vmem>>, %arg7: memref<1x128xf32, #tpu.memory_space<vmem>>, %arg8: memref<124x128xf32, #tpu.memory_space<vmem>>, %arg9: memref<124x128xf32, #tpu.memory_space<vmem>>, %arg10: memref<1024x128xf32, #tpu.memory_space<vmem>>, %arg11: memref<1x128xf32, #tpu.memory_space<vmem>>, %arg12: memref<124x128xf32, #tpu.memory_space<vmem>>, %arg13: memref<124x128xf32, #tpu.memory_space<vmem>>, %arg14: memref<256x128xf32, #tpu.memory_space<vmem>>) attributes {dimension_semantics = [#tpu.dimension_semantics<arbitrary>], iteration_bounds = array<i64: 1>, scalar_prefetch = 1 : i64, scratch_operands = 0 : i64, tpu.core_type = #tpu.core_type<tc>, window_params = [{pipeline_mode = #tpu.pipeline_mode<synchronous>, transform_indices = @transform_0, window_bounds = array<i64: 8, 1024>}, {pipeline_mode = #tpu.pipeline_mode<synchronous>, transform_indices = @transform_1, window_bounds = array<i64: 8, 1024>}, {pipeline_mode = #tpu.pipeline_mode<synchronous>, transform_indices = @transform_2, window_bounds = array<i64: 1024, 128>}, {pipeline_mode = #tpu.pipeline_mode<synchronous>, transform_indices = @transform_3, window_bounds = array<i64: 1024, 128>}, {pipeline_mode = #tpu.pipeline_mode<synchronous>, transform_indices = @transform_4, window_bounds = array<i64: 1, 128>}, {pipeline_mode = #tpu.pipeline_mode<synchronous>, transform_indices = @transform_5, window_bounds = array<i64: 1, 128>}, {pipeline_mode = #tpu.pipeline_mode<synchronous>, transform_indices = @transform_6, window_bounds = array<i64: 124, 128>}, {pipeline_mode = #tpu.pipeline_mode<synchronous>, transform_indices = @transform_7, window_bounds = array<i64: 124, 128>}, {pipeline_mode = #tpu.pipeline_mode<synchronous>, transform_indices = @transform_8, window_bounds = array<i64: 1024, 128>}, {pipeline_mode = #tpu.pipeline_mode<synchronous>, transform_indices = @transform_9, window_bounds = array<i64: 1, 128>}, {pipeline_mode = #tpu.pipeline_mode<synchronous>, transform_indices = @transform_10, window_bounds = array<i64: 124, 128>}, {pipeline_mode = #tpu.pipeline_mode<synchronous>, transform_indices = @transform_11, window_bounds = array<i64: 124, 128>}, {pipeline_mode = #tpu.pipeline_mode<synchronous>, transform_indices = @transform_12, window_bounds = array<i64: 256, 128>}]} {
    %c0 = arith.constant 0 : index
    %c0_0 = arith.constant 0 : index
    %0 = vector.load %arg5[%c0, %c0_0] : memref<1024x128xf32, #tpu.memory_space<vmem>>, vector<1024x128xf32>
    %cst = arith.constant 9.990000e-01 : f32
    %1 = vector.broadcast %cst : f32 to vector<1024x128xf32>
    %2 = arith.mulf %1, %0 : vector<1024x128xf32>
    %c0_1 = arith.constant 0 : index
    %c0_2 = arith.constant 0 : index
    %3 = vector.load %arg4[%c0_1, %c0_2] : memref<1024x128xf32, #tpu.memory_space<vmem>>, vector<1024x128xf32>
    %cst_3 = arith.constant 1.000000e-03 : f32
    %4 = vector.broadcast %cst_3 : f32 to vector<1024x128xf32>
    %5 = arith.mulf %4, %3 : vector<1024x128xf32>
    %6 = arith.addf %2, %5 : vector<1024x128xf32>
    %c0_4 = arith.constant 0 : index
    %c0_5 = arith.constant 0 : index
    %7 = vector.load %arg10[%c0_4, %c0_5] : memref<1024x128xf32, #tpu.memory_space<vmem>>, vector<1024x128xf32>
    tpu.vector_store %arg10[%c0_4, %c0_5], %6 {strides = array<i32>} : memref<1024x128xf32, #tpu.memory_space<vmem>>, vector<1024x128xf32>,
    %c0_6 = arith.constant 0 : index
    %c0_7 = arith.constant 0 : index
    %8 = vector.load %arg7[%c0_6, %c0_7] : memref<1x128xf32, #tpu.memory_space<vmem>>, vector<1x128xf32>
    %cst_8 = arith.constant 9.990000e-01 : f32
    %9 = vector.broadcast %cst_8 : f32 to vector<1x128xf32>
    %10 = arith.mulf %9, %8 : vector<1x128xf32>
    %c0_9 = arith.constant 0 : index
    %c0_10 = arith.constant 0 : index
    %11 = vector.load %arg6[%c0_9, %c0_10] : memref<1x128xf32, #tpu.memory_space<vmem>>, vector<1x128xf32>
    %cst_11 = arith.constant 1.000000e-03 : f32
    %12 = vector.broadcast %cst_11 : f32 to vector<1x128xf32>
    %13 = arith.mulf %12, %11 : vector<1x128xf32>
    %14 = arith.addf %10, %13 : vector<1x128xf32>
    %c0_12 = arith.constant 0 : index
    %c0_13 = arith.constant 0 : index
    %15 = vector.load %arg11[%c0_12, %c0_13] : memref<1x128xf32, #tpu.memory_space<vmem>>, vector<1x128xf32>
    tpu.vector_store %arg11[%c0_12, %c0_13], %14 {strides = array<i32>} : memref<1x128xf32, #tpu.memory_space<vmem>>, vector<1x128xf32>,
    %c0_14 = arith.constant 0 : index
    %c0_15 = arith.constant 0 : index
    %16 = vector.load %arg2[%c0_14, %c0_15] : memref<8x1024xf32, #tpu.memory_space<vmem>>, vector<8x1024xf32>
    %c0_16 = arith.constant 0 : index
    %c0_17 = arith.constant 0 : index
    %17 = vector.load %arg4[%c0_16, %c0_17] : memref<1024x128xf32, #tpu.memory_space<vmem>>, vector<1024x128xf32>
    %cst_18 = arith.constant dense<0.000000e+00> : vector<8x128xf32>
    %18 = tpu.matmul %16, %17, %cst_18 {dimension_numbers = #tpu.dot_dimension_numbers<[1], [0], [0], [1], [0, 0, 1, 1], [], []>} : vector<8x1024xf32>, vector<1024x128xf32>, vector<8x128xf32> -> vector<8x128xf32>
    %c0_19 = arith.constant 0 : index
    %c0_20 = arith.constant 0 : index
    %19 = vector.load %arg6[%c0_19, %c0_20] : memref<1x128xf32, #tpu.memory_space<vmem>>, vector<1x128xf32>
    %20 = vector.broadcast %19 : vector<1x128xf32> to vector<8x128xf32>
    %21 = arith.addf %18, %20 : vector<8x128xf32>
    %22 = arith.mulf %21, %21 : vector<8x128xf32>
    %cst_21 = arith.constant dense<0.000000e+00> : vector<8xf32>
    %23 = vector.multi_reduction <add>, %22, %cst_21 [1] : vector<8x128xf32> to vector<8xf32>
    %24 = vector.shape_cast %23 : vector<8xf32> to vector<8x1xf32>
    %cst_22 = arith.constant 1.000000e-24 : f32
    %25 = vector.broadcast %cst_22 : f32 to vector<8x1xf32>
    %26 = arith.maximumf %24, %25 : vector<8x1xf32>
    %27 = math.rsqrt %26 : vector<8x1xf32>
    %28 = vector.broadcast %27 : vector<8x1xf32> to vector<8x128xf32>
    %29 = arith.mulf %21, %28 : vector<8x128xf32>
    %c0_23 = arith.constant 0 : index
    %c0_24 = arith.constant 0 : index
    %30 = vector.load %arg3[%c0_23, %c0_24] : memref<8x1024xf32, #tpu.memory_space<vmem>>, vector<8x1024xf32>
    %c0_25 = arith.constant 0 : index
    %c0_26 = arith.constant 0 : index
    %31 = vector.load %arg10[%c0_25, %c0_26] : memref<1024x128xf32, #tpu.memory_space<vmem>>, vector<1024x128xf32>
    %cst_27 = arith.constant dense<0.000000e+00> : vector<8x128xf32>
    %32 = tpu.matmul %30, %31, %cst_27 {dimension_numbers = #tpu.dot_dimension_numbers<[1], [0], [0], [1], [0, 0, 1, 1], [], []>} : vector<8x1024xf32>, vector<1024x128xf32>, vector<8x128xf32> -> vector<8x128xf32>
    %c0_28 = arith.constant 0 : index
    %c0_29 = arith.constant 0 : index
    %33 = vector.load %arg11[%c0_28, %c0_29] : memref<1x128xf32, #tpu.memory_space<vmem>>, vector<1x128xf32>
    %34 = vector.broadcast %33 : vector<1x128xf32> to vector<8x128xf32>
    %35 = arith.addf %32, %34 : vector<8x128xf32>
    %36 = arith.mulf %35, %35 : vector<8x128xf32>
    %cst_30 = arith.constant dense<0.000000e+00> : vector<8xf32>
    %37 = vector.multi_reduction <add>, %36, %cst_30 [1] : vector<8x128xf32> to vector<8xf32>
    %38 = vector.shape_cast %37 : vector<8xf32> to vector<8x1xf32>
    %cst_31 = arith.constant 1.000000e-24 : f32
    %39 = vector.broadcast %cst_31 : f32 to vector<8x1xf32>
    %40 = arith.maximumf %38, %39 : vector<8x1xf32>
    %41 = math.rsqrt %40 : vector<8x1xf32>
    %42 = vector.broadcast %41 : vector<8x1xf32> to vector<8x128xf32>
    %43 = arith.mulf %35, %42 : vector<8x128xf32>
    %c0_32 = arith.constant 0 : index
    %c0_33 = arith.constant 0 : index
    %44 = vector.load %arg8[%c0_32, %c0_33] : memref<124x128xf32, #tpu.memory_space<vmem>>, vector<124x128xf32>
    %c0_34 = arith.constant 0 : index
    %c0_35 = arith.constant 0 : index
    %45 = vector.load %arg12[%c0_34, %c0_35] : memref<124x128xf32, #tpu.memory_space<vmem>>, vector<124x128xf32>
    tpu.vector_store %arg12[%c0_34, %c0_35], %44 {strides = array<i32>} : memref<124x128xf32, #tpu.memory_space<vmem>>, vector<124x128xf32>,
    %c0_36 = arith.constant 0 : index
    %c0_37 = arith.constant 0 : index
    %46 = vector.load %arg9[%c0_36, %c0_37] : memref<124x128xf32, #tpu.memory_space<vmem>>, vector<124x128xf32>
    %c0_38 = arith.constant 0 : index
    %c0_39 = arith.constant 0 : index
    %47 = vector.load %arg13[%c0_38, %c0_39] : memref<124x128xf32, #tpu.memory_space<vmem>>, vector<124x128xf32>
    tpu.vector_store %arg13[%c0_38, %c0_39], %46 {strides = array<i32>} : memref<124x128xf32, #tpu.memory_space<vmem>>, vector<124x128xf32>,
    %c0_40 = arith.constant 0 : index
    %c0_41 = arith.constant 0 : index
    %48 = memref.load %arg1[%c0_40, %c0_41] : memref<2x8xi32, #tpu.memory_space<smem>>
    %c1 = arith.constant 1 : index
    %c0_42 = arith.constant 0 : index
    %49 = memref.load %arg1[%c1, %c0_42] : memref<2x8xi32, #tpu.memory_space<smem>>
    %50 = vector.extract_strided_slice %43 {offsets = [0, 0], sizes = [1, 128], strides = [1, 1]} : vector<8x128xf32> to vector<1x128xf32>
    %c124_i32 = arith.constant 124 : i32
    %51 = arith.cmpi slt, %48, %c124_i32 : i32
    %52 = arith.extui %51 : i1 to i32
    %c0_i32 = arith.constant 0 : i32
    %53 = arith.cmpi ne, %52, %c0_i32 : i32
    scf.if %53 {
      %125 = arith.index_cast %48 : i32 to index
      %c0_103 = arith.constant 0 : index
      %126 = vector.load %arg12[%125, %c0_103] : memref<124x128xf32, #tpu.memory_space<vmem>>, vector<1x128xf32>
      tpu.vector_store %arg12[%125, %c0_103], %50 {strides = array<i32>} : memref<124x128xf32, #tpu.memory_space<vmem>>, vector<1x128xf32>,
    } else {
    }
    %c124_i32_43 = arith.constant 124 : i32
    %54 = arith.cmpi slt, %49, %c124_i32_43 : i32
    %55 = arith.extui %54 : i1 to i32
    %c0_i32_44 = arith.constant 0 : i32
    %56 = arith.cmpi ne, %55, %c0_i32_44 : i32
    scf.if %56 {
      %125 = arith.index_cast %49 : i32 to index
      %c0_103 = arith.constant 0 : index
      %126 = vector.load %arg13[%125, %c0_103] : memref<124x128xf32, #tpu.memory_space<vmem>>, vector<1x128xf32>
      tpu.vector_store %arg13[%125, %c0_103], %50 {strides = array<i32>} : memref<124x128xf32, #tpu.memory_space<vmem>>, vector<1x128xf32>,
    } else {
    }
    %c0_45 = arith.constant 0 : index
    %c1_46 = arith.constant 1 : index
    %57 = memref.load %arg1[%c0_45, %c1_46] : memref<2x8xi32, #tpu.memory_space<smem>>
    %c1_47 = arith.constant 1 : index
    %c1_48 = arith.constant 1 : index
    %58 = memref.load %arg1[%c1_47, %c1_48] : memref<2x8xi32, #tpu.memory_space<smem>>
    %59 = vector.extract_strided_slice %43 {offsets = [1, 0], sizes = [1, 128], strides = [1, 1]} : vector<8x128xf32> to vector<1x128xf32>
    %c124_i32_49 = arith.constant 124 : i32
    %60 = arith.cmpi slt, %57, %c124_i32_49 : i32
    %61 = arith.extui %60 : i1 to i32
    %c0_i32_50 = arith.constant 0 : i32
    %62 = arith.cmpi ne, %61, %c0_i32_50 : i32
    scf.if %62 {
      %125 = arith.index_cast %57 : i32 to index
      %c0_103 = arith.constant 0 : index
      %126 = vector.load %arg12[%125, %c0_103] : memref<124x128xf32, #tpu.memory_space<vmem>>, vector<1x128xf32>
      tpu.vector_store %arg12[%125, %c0_103], %59 {strides = array<i32>} : memref<124x128xf32, #tpu.memory_space<vmem>>, vector<1x128xf32>,
    } else {
    }
    %c124_i32_51 = arith.constant 124 : i32
    %63 = arith.cmpi slt, %58, %c124_i32_51 : i32
    %64 = arith.extui %63 : i1 to i32
    %c0_i32_52 = arith.constant 0 : i32
    %65 = arith.cmpi ne, %64, %c0_i32_52 : i32
    scf.if %65 {
      %125 = arith.index_cast %58 : i32 to index
      %c0_103 = arith.constant 0 : index
      %126 = vector.load %arg13[%125, %c0_103] : memref<124x128xf32, #tpu.memory_space<vmem>>, vector<1x128xf32>
      tpu.vector_store %arg13[%125, %c0_103], %59 {strides = array<i32>} : memref<124x128xf32, #tpu.memory_space<vmem>>, vector<1x128xf32>,
    } else {
    }
    %c0_53 = arith.constant 0 : index
    %c2 = arith.constant 2 : index
    %66 = memref.load %arg1[%c0_53, %c2] : memref<2x8xi32, #tpu.memory_space<smem>>
    %c1_54 = arith.constant 1 : index
    %c2_55 = arith.constant 2 : index
    %67 = memref.load %arg1[%c1_54, %c2_55] : memref<2x8xi32, #tpu.memory_space<smem>>
    %68 = vector.extract_strided_slice %43 {offsets = [2, 0], sizes = [1, 128], strides = [1, 1]} : vector<8x128xf32> to vector<1x128xf32>
    %c124_i32_56 = arith.constant 124 : i32
    %69 = arith.cmpi slt, %66, %c124_i32_56 : i32
    %70 = arith.extui %69 : i1 to i32
    %c0_i32_57 = arith.constant 0 : i32
    %71 = arith.cmpi ne, %70, %c0_i32_57 : i32
    scf.if %71 {
      %125 = arith.index_cast %66 : i32 to index
      %c0_103 = arith.constant 0 : index
      %126 = vector.load %arg12[%125, %c0_103] : memref<124x128xf32, #tpu.memory_space<vmem>>, vector<1x128xf32>
      tpu.vector_store %arg12[%125, %c0_103], %68 {strides = array<i32>} : memref<124x128xf32, #tpu.memory_space<vmem>>, vector<1x128xf32>,
    } else {
    }
    %c124_i32_58 = arith.constant 124 : i32
    %72 = arith.cmpi slt, %67, %c124_i32_58 : i32
    %73 = arith.extui %72 : i1 to i32
    %c0_i32_59 = arith.constant 0 : i32
    %74 = arith.cmpi ne, %73, %c0_i32_59 : i32
    scf.if %74 {
      %125 = arith.index_cast %67 : i32 to index
      %c0_103 = arith.constant 0 : index
      %126 = vector.load %arg13[%125, %c0_103] : memref<124x128xf32, #tpu.memory_space<vmem>>, vector<1x128xf32>
      tpu.vector_store %arg13[%125, %c0_103], %68 {strides = array<i32>} : memref<124x128xf32, #tpu.memory_space<vmem>>, vector<1x128xf32>,
    } else {
    }
    %c0_60 = arith.constant 0 : index
    %c3 = arith.constant 3 : index
    %75 = memref.load %arg1[%c0_60, %c3] : memref<2x8xi32, #tpu.memory_space<smem>>
    %c1_61 = arith.constant 1 : index
    %c3_62 = arith.constant 3 : index
    %76 = memref.load %arg1[%c1_61, %c3_62] : memref<2x8xi32, #tpu.memory_space<smem>>
    %77 = vector.extract_strided_slice %43 {offsets = [3, 0], sizes = [1, 128], strides = [1, 1]} : vector<8x128xf32> to vector<1x128xf32>
    %c124_i32_63 = arith.constant 124 : i32
    %78 = arith.cmpi slt, %75, %c124_i32_63 : i32
    %79 = arith.extui %78 : i1 to i32
    %c0_i32_64 = arith.constant 0 : i32
    %80 = arith.cmpi ne, %79, %c0_i32_64 : i32
    scf.if %80 {
      %125 = arith.index_cast %75 : i32 to index
      %c0_103 = arith.constant 0 : index
      %126 = vector.load %arg12[%125, %c0_103] : memref<124x128xf32, #tpu.memory_space<vmem>>, vector<1x128xf32>
      tpu.vector_store %arg12[%125, %c0_103], %77 {strides = array<i32>} : memref<124x128xf32, #tpu.memory_space<vmem>>, vector<1x128xf32>,
    } else {
    }
    %c124_i32_65 = arith.constant 124 : i32
    %81 = arith.cmpi slt, %76, %c124_i32_65 : i32
    %82 = arith.extui %81 : i1 to i32
    %c0_i32_66 = arith.constant 0 : i32
    %83 = arith.cmpi ne, %82, %c0_i32_66 : i32
    scf.if %83 {
      %125 = arith.index_cast %76 : i32 to index
      %c0_103 = arith.constant 0 : index
      %126 = vector.load %arg13[%125, %c0_103] : memref<124x128xf32, #tpu.memory_space<vmem>>, vector<1x128xf32>
      tpu.vector_store %arg13[%125, %c0_103], %77 {strides = array<i32>} : memref<124x128xf32, #tpu.memory_space<vmem>>, vector<1x128xf32>,
    } else {
    }
    %c0_67 = arith.constant 0 : index
    %c4 = arith.constant 4 : index
    %84 = memref.load %arg1[%c0_67, %c4] : memref<2x8xi32, #tpu.memory_space<smem>>
    %c1_68 = arith.constant 1 : index
    %c4_69 = arith.constant 4 : index
    %85 = memref.load %arg1[%c1_68, %c4_69] : memref<2x8xi32, #tpu.memory_space<smem>>
    %86 = vector.extract_strided_slice %43 {offsets = [4, 0], sizes = [1, 128], strides = [1, 1]} : vector<8x128xf32> to vector<1x128xf32>
    %c124_i32_70 = arith.constant 124 : i32
    %87 = arith.cmpi slt, %84, %c124_i32_70 : i32
    %88 = arith.extui %87 : i1 to i32
    %c0_i32_71 = arith.constant 0 : i32
    %89 = arith.cmpi ne, %88, %c0_i32_71 : i32
    scf.if %89 {
      %125 = arith.index_cast %84 : i32 to index
      %c0_103 = arith.constant 0 : index
      %126 = vector.load %arg12[%125, %c0_103] : memref<124x128xf32, #tpu.memory_space<vmem>>, vector<1x128xf32>
      tpu.vector_store %arg12[%125, %c0_103], %86 {strides = array<i32>} : memref<124x128xf32, #tpu.memory_space<vmem>>, vector<1x128xf32>,
    } else {
    }
    %c124_i32_72 = arith.constant 124 : i32
    %90 = arith.cmpi slt, %85, %c124_i32_72 : i32
    %91 = arith.extui %90 : i1 to i32
    %c0_i32_73 = arith.constant 0 : i32
    %92 = arith.cmpi ne, %91, %c0_i32_73 : i32
    scf.if %92 {
      %125 = arith.index_cast %85 : i32 to index
      %c0_103 = arith.constant 0 : index
      %126 = vector.load %arg13[%125, %c0_103] : memref<124x128xf32, #tpu.memory_space<vmem>>, vector<1x128xf32>
      tpu.vector_store %arg13[%125, %c0_103], %86 {strides = array<i32>} : memref<124x128xf32, #tpu.memory_space<vmem>>, vector<1x128xf32>,
    } else {
    }
    %c0_74 = arith.constant 0 : index
    %c5 = arith.constant 5 : index
    %93 = memref.load %arg1[%c0_74, %c5] : memref<2x8xi32, #tpu.memory_space<smem>>
    %c1_75 = arith.constant 1 : index
    %c5_76 = arith.constant 5 : index
    %94 = memref.load %arg1[%c1_75, %c5_76] : memref<2x8xi32, #tpu.memory_space<smem>>
    %95 = vector.extract_strided_slice %43 {offsets = [5, 0], sizes = [1, 128], strides = [1, 1]} : vector<8x128xf32> to vector<1x128xf32>
    %c124_i32_77 = arith.constant 124 : i32
    %96 = arith.cmpi slt, %93, %c124_i32_77 : i32
    %97 = arith.extui %96 : i1 to i32
    %c0_i32_78 = arith.constant 0 : i32
    %98 = arith.cmpi ne, %97, %c0_i32_78 : i32
    scf.if %98 {
      %125 = arith.index_cast %93 : i32 to index
      %c0_103 = arith.constant 0 : index
      %126 = vector.load %arg12[%125, %c0_103] : memref<124x128xf32, #tpu.memory_space<vmem>>, vector<1x128xf32>
      tpu.vector_store %arg12[%125, %c0_103], %95 {strides = array<i32>} : memref<124x128xf32, #tpu.memory_space<vmem>>, vector<1x128xf32>,
    } else {
    }
    %c124_i32_79 = arith.constant 124 : i32
    %99 = arith.cmpi slt, %94, %c124_i32_79 : i32
    %100 = arith.extui %99 : i1 to i32
    %c0_i32_80 = arith.constant 0 : i32
    %101 = arith.cmpi ne, %100, %c0_i32_80 : i32
    scf.if %101 {
      %125 = arith.index_cast %94 : i32 to index
      %c0_103 = arith.constant 0 : index
      %126 = vector.load %arg13[%125, %c0_103] : memref<124x128xf32, #tpu.memory_space<vmem>>, vector<1x128xf32>
      tpu.vector_store %arg13[%125, %c0_103], %95 {strides = array<i32>} : memref<124x128xf32, #tpu.memory_space<vmem>>, vector<1x128xf32>,
    } else {
    }
    %c0_81 = arith.constant 0 : index
    %c6 = arith.constant 6 : index
    %102 = memref.load %arg1[%c0_81, %c6] : memref<2x8xi32, #tpu.memory_space<smem>>
    %c1_82 = arith.constant 1 : index
    %c6_83 = arith.constant 6 : index
    %103 = memref.load %arg1[%c1_82, %c6_83] : memref<2x8xi32, #tpu.memory_space<smem>>
    %104 = vector.extract_strided_slice %43 {offsets = [6, 0], sizes = [1, 128], strides = [1, 1]} : vector<8x128xf32> to vector<1x128xf32>
    %c124_i32_84 = arith.constant 124 : i32
    %105 = arith.cmpi slt, %102, %c124_i32_84 : i32
    %106 = arith.extui %105 : i1 to i32
    %c0_i32_85 = arith.constant 0 : i32
    %107 = arith.cmpi ne, %106, %c0_i32_85 : i32
    scf.if %107 {
      %125 = arith.index_cast %102 : i32 to index
      %c0_103 = arith.constant 0 : index
      %126 = vector.load %arg12[%125, %c0_103] : memref<124x128xf32, #tpu.memory_space<vmem>>, vector<1x128xf32>
      tpu.vector_store %arg12[%125, %c0_103], %104 {strides = array<i32>} : memref<124x128xf32, #tpu.memory_space<vmem>>, vector<1x128xf32>,
    } else {
    }
    %c124_i32_86 = arith.constant 124 : i32
    %108 = arith.cmpi slt, %103, %c124_i32_86 : i32
    %109 = arith.extui %108 : i1 to i32
    %c0_i32_87 = arith.constant 0 : i32
    %110 = arith.cmpi ne, %109, %c0_i32_87 : i32
    scf.if %110 {
      %125 = arith.index_cast %103 : i32 to index
      %c0_103 = arith.constant 0 : index
      %126 = vector.load %arg13[%125, %c0_103] : memref<124x128xf32, #tpu.memory_space<vmem>>, vector<1x128xf32>
      tpu.vector_store %arg13[%125, %c0_103], %104 {strides = array<i32>} : memref<124x128xf32, #tpu.memory_space<vmem>>, vector<1x128xf32>,
    } else {
    }
    %c0_88 = arith.constant 0 : index
    %c7 = arith.constant 7 : index
    %111 = memref.load %arg1[%c0_88, %c7] : memref<2x8xi32, #tpu.memory_space<smem>>
    %c1_89 = arith.constant 1 : index
    %c7_90 = arith.constant 7 : index
    %112 = memref.load %arg1[%c1_89, %c7_90] : memref<2x8xi32, #tpu.memory_space<smem>>
    %113 = vector.extract_strided_slice %43 {offsets = [7, 0], sizes = [1, 128], strides = [1, 1]} : vector<8x128xf32> to vector<1x128xf32>
    %c124_i32_91 = arith.constant 124 : i32
    %114 = arith.cmpi slt, %111, %c124_i32_91 : i32
    %115 = arith.extui %114 : i1 to i32
    %c0_i32_92 = arith.constant 0 : i32
    %116 = arith.cmpi ne, %115, %c0_i32_92 : i32
    scf.if %116 {
      %125 = arith.index_cast %111 : i32 to index
      %c0_103 = arith.constant 0 : index
      %126 = vector.load %arg12[%125, %c0_103] : memref<124x128xf32, #tpu.memory_space<vmem>>, vector<1x128xf32>
      tpu.vector_store %arg12[%125, %c0_103], %113 {strides = array<i32>} : memref<124x128xf32, #tpu.memory_space<vmem>>, vector<1x128xf32>,
    } else {
    }
    %c124_i32_93 = arith.constant 124 : i32
    %117 = arith.cmpi slt, %112, %c124_i32_93 : i32
    %118 = arith.extui %117 : i1 to i32
    %c0_i32_94 = arith.constant 0 : i32
    %119 = arith.cmpi ne, %118, %c0_i32_94 : i32
    scf.if %119 {
      %125 = arith.index_cast %112 : i32 to index
      %c0_103 = arith.constant 0 : index
      %126 = vector.load %arg13[%125, %c0_103] : memref<124x128xf32, #tpu.memory_space<vmem>>, vector<1x128xf32>
      tpu.vector_store %arg13[%125, %c0_103], %113 {strides = array<i32>} : memref<124x128xf32, #tpu.memory_space<vmem>>, vector<1x128xf32>,
    } else {
    }
    %c0_95 = arith.constant 0 : index
    %c0_96 = arith.constant 0 : index
    %120 = vector.load %arg14[%c0_95, %c0_96] : memref<256x128xf32, #tpu.memory_space<vmem>>, vector<8x128xf32>
    tpu.vector_store %arg14[%c0_95, %c0_96], %29 {strides = array<i32>} : memref<256x128xf32, #tpu.memory_space<vmem>>, vector<8x128xf32>,
    %c0_97 = arith.constant 0 : index
    %c0_98 = arith.constant 0 : index
    %121 = vector.load %arg12[%c0_97, %c0_98] : memref<124x128xf32, #tpu.memory_space<vmem>>, vector<124x128xf32>
    %c8 = arith.constant 8 : index
    %c0_99 = arith.constant 0 : index
    %122 = vector.load %arg14[%c8, %c0_99] : memref<256x128xf32, #tpu.memory_space<vmem>>, vector<124x128xf32>
    tpu.vector_store %arg14[%c8, %c0_99], %121 {strides = array<i32>} : memref<256x128xf32, #tpu.memory_space<vmem>>, vector<124x128xf32>,
    %c0_100 = arith.constant 0 : index
    %c0_101 = arith.constant 0 : index
    %123 = vector.load %arg13[%c0_100, %c0_101] : memref<124x128xf32, #tpu.memory_space<vmem>>, vector<124x128xf32>
    %c132 = arith.constant 132 : index
    %c0_102 = arith.constant 0 : index
    %124 = vector.load %arg14[%c132, %c0_102] : memref<256x128xf32, #tpu.memory_space<vmem>>, vector<124x128xf32>
    tpu.vector_store %arg14[%c132, %c0_102], %123 {strides = array<i32>} : memref<256x128xf32, #tpu.memory_space<vmem>>, vector<124x128xf32>,
    return
  }
  func.func @transform_0(%arg0: i32, %arg1: memref<2x8xi32, #tpu.memory_space<smem>>) -> (i32, i32) {
    %c0_i32 = arith.constant 0 : i32
    %c0_i32_0 = arith.constant 0 : i32
    %c0_i32_1 = arith.constant 0 : i32
    return %c0_i32, %c0_i32_0 : i32, i32
  }
  func.func @transform_1(%arg0: i32, %arg1: memref<2x8xi32, #tpu.memory_space<smem>>) -> (i32, i32) {
    %c0_i32 = arith.constant 0 : i32
    %c0_i32_0 = arith.constant 0 : i32
    %c0_i32_1 = arith.constant 0 : i32
    return %c0_i32, %c0_i32_0 : i32, i32
  }
  func.func @transform_2(%arg0: i32, %arg1: memref<2x8xi32, #tpu.memory_space<smem>>) -> (i32, i32) {
    %c0_i32 = arith.constant 0 : i32
    %c0_i32_0 = arith.constant 0 : i32
    %c0_i32_1 = arith.constant 0 : i32
    return %c0_i32, %c0_i32_0 : i32, i32
  }
  func.func @transform_3(%arg0: i32, %arg1: memref<2x8xi32, #tpu.memory_space<smem>>) -> (i32, i32) {
    %c0_i32 = arith.constant 0 : i32
    %c0_i32_0 = arith.constant 0 : i32
    %c0_i32_1 = arith.constant 0 : i32
    return %c0_i32, %c0_i32_0 : i32, i32
  }
  func.func @transform_4(%arg0: i32, %arg1: memref<2x8xi32, #tpu.memory_space<smem>>) -> (i32, i32) {
    %c0_i32 = arith.constant 0 : i32
    %c0_i32_0 = arith.constant 0 : i32
    %c0_i32_1 = arith.constant 0 : i32
    return %c0_i32, %c0_i32_0 : i32, i32
  }
  func.func @transform_5(%arg0: i32, %arg1: memref<2x8xi32, #tpu.memory_space<smem>>) -> (i32, i32) {
    %c0_i32 = arith.constant 0 : i32
    %c0_i32_0 = arith.constant 0 : i32
    %c0_i32_1 = arith.constant 0 : i32
    return %c0_i32, %c0_i32_0 : i32, i32
  }
  func.func @transform_6(%arg0: i32, %arg1: memref<2x8xi32, #tpu.memory_space<smem>>) -> (i32, i32) {
    %c0_i32 = arith.constant 0 : i32
    %c0_i32_0 = arith.constant 0 : i32
    %c0_i32_1 = arith.constant 0 : i32
    return %c0_i32, %c0_i32_0 : i32, i32
  }
  func.func @transform_7(%arg0: i32, %arg1: memref<2x8xi32, #tpu.memory_space<smem>>) -> (i32, i32) {
    %c0_i32 = arith.constant 0 : i32
    %c0_i32_0 = arith.constant 0 : i32
    %c0_i32_1 = arith.constant 0 : i32
    return %c0_i32, %c0_i32_0 : i32, i32
  }
  func.func @transform_8(%arg0: i32, %arg1: memref<2x8xi32, #tpu.memory_space<smem>>) -> (i32, i32) {
    %c0_i32 = arith.constant 0 : i32
    %c0_i32_0 = arith.constant 0 : i32
    %c0_i32_1 = arith.constant 0 : i32
    return %c0_i32, %c0_i32_0 : i32, i32
  }
  func.func @transform_9(%arg0: i32, %arg1: memref<2x8xi32, #tpu.memory_space<smem>>) -> (i32, i32) {
    %c0_i32 = arith.constant 0 : i32
    %c0_i32_0 = arith.constant 0 : i32
    %c0_i32_1 = arith.constant 0 : i32
    return %c0_i32, %c0_i32_0 : i32, i32
  }
  func.func @transform_10(%arg0: i32, %arg1: memref<2x8xi32, #tpu.memory_space<smem>>) -> (i32, i32) {
    %c0_i32 = arith.constant 0 : i32
    %c0_i32_0 = arith.constant 0 : i32
    %c0_i32_1 = arith.constant 0 : i32
    return %c0_i32, %c0_i32_0 : i32, i32
  }
  func.func @transform_11(%arg0: i32, %arg1: memref<2x8xi32, #tpu.memory_space<smem>>) -> (i32, i32) {
    %c0_i32 = arith.constant 0 : i32
    %c0_i32_0 = arith.constant 0 : i32
    %c0_i32_1 = arith.constant 0 : i32
    return %c0_i32, %c0_i32_0 : i32, i32
  }
  func.func @transform_12(%arg0: i32, %arg1: memref<2x8xi32, #tpu.memory_space<smem>>) -> (i32, i32) {
    %c0_i32 = arith.constant 0 : i32
    %c0_i32_0 = arith.constant 0 : i32
    %c0_i32_1 = arith.constant 0 : i32
    return %c0_i32, %c0_i32_0 : i32, i32
  }
}

</mosaic_0001>

<llo_original>
// kernel: tpu_custom_call.1
$region0: #{tpu_custom_call.1}
  #allocation0 [shape = 'u32[]', space=smem, size = 0x4, offset = 0x4, fixed_abs, tag = 'smem constant byte address 0x4 - core index']
  #allocation1 [shape = 'u32[72,128]{1,0:T(1,128)}', space=vmem, size = 0x9000, scoped, tag = 'internal scratch']
  #allocation2 [shape = 's32[1]{0}', space=sflag, size = 0x4, scoped, tag = 'scoped memory for tpu_custom_call.1']
  #allocation3 [shape = 'u8[1024]{0}', space=smem, size = 0x400, scoped, tag = 'prefetched SMEM operand 0']
  %s0 = inlined_call_operand.hbm [shape: s32[2,8], index: 0, kind: input, shape index: {}]
  %s1 = inlined_call_operand.hbm [shape: f32[8,1024], index: 1, kind: input, shape index: {}]
  %s2 = inlined_call_operand.hbm [shape: f32[8,1024], index: 2, kind: input, shape index: {}]
  %s3 = inlined_call_operand.hbm [shape: f32[1024,128], index: 3, kind: input, shape index: {}]
  %s4 = inlined_call_operand.hbm [shape: f32[1024,128], index: 4, kind: input, shape index: {}]
  %s5 = inlined_call_operand.vmem [shape: f32[1,128], index: 5, kind: input, shape index: {}]
  %s6 = inlined_call_operand.vmem [shape: f32[1,128], index: 6, kind: input, shape index: {}]
  %s7 = inlined_call_operand.hbm [shape: f32[124,128], index: 7, kind: input, shape index: {}]
  %s8 = inlined_call_operand.hbm [shape: f32[124,128], index: 8, kind: input, shape index: {}]
  %s9 = inlined_call_operand.hbm [shape: f32[1024,128], index: 9, kind: output, shape index: {0}]
  %s10 = inlined_call_operand.hbm [shape: f32[1,128], index: 10, kind: output, shape index: {1}]
  %s11 = inlined_call_operand.hbm [shape: f32[124,128], index: 11, kind: output, shape index: {2}]
  %s12 = inlined_call_operand.hbm [shape: f32[124,128], index: 12, kind: output, shape index: {3}]
  %s13 = inlined_call_operand.hbm [shape: f32[256,128], index: 13, kind: output, shape index: {4}]
  %14 = xla_tuple %s9, %s10, %s11, %s12, %s13
  %s15 = sld [smem:[#allocation0]]
  $region162: #{tpu_custom_call.1} parent=0
    _
  %s17 = ssub.s32 1, %s15
  %s18 = scalar_select 0, %s17, %s15
  %s20 = sshll.u32 %s0, 4
  %s21 = int_to_ptr.hbm [resolvable:$true] %s20
  %23 = dma.hbm_to_smem %s21, 32, [#allocation3], [#allocation2]
  %25 = dma.done [#allocation2], 32
  %26 = sfence
  $region1: #{tpu_custom_call.1} parent=0
    #allocation4 [shape = 'u8[32768]{0}', space=vmem, size = 0x8000, scoped, tag = 'input window, operand 1, single buffered']
    #allocation5 [shape = 's32[1]{0}', space=sflag, size = 0x4, scoped, tag = 'scoped memory for tpu_custom_call.1']
    #allocation6 [shape = 's32[1]{0}', space=sflag, size = 0x4, scoped, tag = 'scoped memory for tpu_custom_call.1']
    #allocation7 [shape = 'u8[32768]{0}', space=vmem, size = 0x8000, scoped, tag = 'input window, operand 2, single buffered']
    #allocation8 [shape = 's32[1]{0}', space=sflag, size = 0x4, scoped, tag = 'scoped memory for tpu_custom_call.1']
    #allocation9 [shape = 'u8[524288]{0}', space=vmem, size = 0x80000, scoped, tag = 'input window, operand 3, single buffered']
    #allocation10 [shape = 'u8[524288]{0}', space=vmem, size = 0x80000, scoped, tag = 'input window, operand 4, single buffered']
    #allocation11 [shape = 's32[1]{0}', space=sflag, size = 0x4, scoped, tag = 'scoped memory for tpu_custom_call.1']
    #allocation12 [shape = 'u8[65536]{0}', space=vmem, size = 0x10000, scoped, tag = 'input window, operand 7, single buffered']
    #allocation13 [shape = 'u8[65536]{0}', space=vmem, size = 0x10000, scoped, tag = 'input window, operand 8, single buffered']
    #allocation14 [shape = 's32[1]{0}', space=sflag, size = 0x4, scoped, tag = 'scoped memory for tpu_custom_call.1']
    #allocation15 [shape = 'u8[524288]{0}', space=vmem, size = 0x80000, scoped, tag = 'output window, operand 0, single buffered']
    #allocation16 [shape = 'u8[512]{0}', space=vmem, size = 0x400, scoped, tag = 'output window, operand 1, single buffered']
    #allocation17 [shape = 's32[1]{0}', space=sflag, size = 0x4, scoped, tag = 'scoped memory for tpu_custom_call.1']
    #allocation18 [shape = 'u8[65536]{0}', space=vmem, size = 0x10000, scoped, tag = 'output window, operand 2, single buffered']
    #allocation19 [shape = 'u8[65536]{0}', space=vmem, size = 0x10000, scoped, tag = 'output window, operand 3, single buffered']
    #allocation20 [shape = 's32[1]{0}', space=sflag, size = 0x4, scoped, tag = 'scoped memory for tpu_custom_call.1']
    #allocation21 [shape = 'u8[131072]{0}', space=vmem, size = 0x20000, scoped, tag = 'output window, operand 4, single buffered']
    %27 = vsyncpa [#allocation5], 0
    %28 = vsyncpa [#allocation8], 0
    %29 = vsyncpa [#allocation11], 0
    %30 = vsyncpa [#allocation14], 0
    %31 = vsyncpa [#allocation6], 0
    %32 = vsyncpa [#allocation17], 0
    %33 = vsyncpa [#allocation20], 0
    // Predicated region
    $region2: #{tpu_custom_call.1} parent=1 // pred_check
      _
    $region3: #{tpu_custom_call.1} parent=1 // pred_check_branch
      %35 = sbr.rel (0) target = $region5
    $region4: #{tpu_custom_call.1} parent=1 // pred_region
      %37 = vsyncadd [#allocation5], 0
      %s39 = sshll.u32 %s1, 4
      %s40 = int_to_ptr.hbm [resolvable:$true] %s39
      %s41 = sshll.u32 [#allocation4], 4
      %s42 = int_to_ptr.vmem [resolvable:$true] %s41
      %44 = dma.hbm_to_vmem [thread:$0]  %s40, 1024, %s42, [#allocation5]
    $region5: #{tpu_custom_call.1} parent=1 // pred_fallthru
      _
    // Predicated region
    $region6: #{tpu_custom_call.1} parent=1 // pred_check
      _
    $region7: #{tpu_custom_call.1} parent=1 // pred_check_branch
      %46 = sbr.rel (0) target = $region9
    $region8: #{tpu_custom_call.1} parent=1 // pred_region
      %48 = vsyncadd [#allocation8], 0
      %s50 = sshll.u32 %s2, 4
      %s51 = int_to_ptr.hbm [resolvable:$true] %s50
      %s52 = sshll.u32 [#allocation7], 4
      %s53 = int_to_ptr.vmem [resolvable:$true] %s52
      %55 = dma.hbm_to_vmem [thread:$0]  %s51, 1024, %s53, [#allocation8]
    $region9: #{tpu_custom_call.1} parent=1 // pred_fallthru
      _
    // Predicated region
    $region10: #{tpu_custom_call.1} parent=1 // pred_check
      _
    $region11: #{tpu_custom_call.1} parent=1 // pred_check_branch
      %57 = sbr.rel (0) target = $region13
    $region12: #{tpu_custom_call.1} parent=1 // pred_region
      %59 = vsyncadd [#allocation8], 0
      %s60 = sshll.u32 %s3, 4
      %s61 = int_to_ptr.hbm [resolvable:$true] %s60
      %s62 = sshll.u32 [#allocation9], 4
      %s63 = int_to_ptr.vmem [resolvable:$true] %s62
      %68 = dma.hbm_to_vmem [thread:$0]  %s61, 16384, %s63, [#allocation8], 128, 128, 8
    $region13: #{tpu_custom_call.1} parent=1 // pred_fallthru
      _
    // Predicated region
    $region14: #{tpu_custom_call.1} parent=1 // pred_check
      _
    $region15: #{tpu_custom_call.1} parent=1 // pred_check_branch
      %70 = sbr.rel (0) target = $region17
    $region16: #{tpu_custom_call.1} parent=1 // pred_region
      %72 = vsyncadd [#allocation11], 0
      %s73 = sshll.u32 %s4, 4
      %s74 = int_to_ptr.hbm [resolvable:$true] %s73
      %s75 = sshll.u32 [#allocation10], 4
      %s76 = int_to_ptr.vmem [resolvable:$true] %s75
      %81 = dma.hbm_to_vmem [thread:$0]  %s74, 16384, %s76, [#allocation11], 128, 128, 8
    $region17: #{tpu_custom_call.1} parent=1 // pred_fallthru
      _
    // Predicated region
    $region18: #{tpu_custom_call.1} parent=1 // pred_check
      _
    $region19: #{tpu_custom_call.1} parent=1 // pred_check_branch
      %83 = sbr.rel (0) target = $region21
    $region20: #{tpu_custom_call.1} parent=1 // pred_region
      _
    $region21: #{tpu_custom_call.1} parent=1 // pred_fallthru
      _
    // Predicated region
    $region22: #{tpu_custom_call.1} parent=1 // pred_check
      _
    $region23: #{tpu_custom_call.1} parent=1 // pred_check_branch
      %85 = sbr.rel (0) target = $region25
    $region24: #{tpu_custom_call.1} parent=1 // pred_region
      _
    $region25: #{tpu_custom_call.1} parent=1 // pred_fallthru
      _
    // Predicated region
    $region26: #{tpu_custom_call.1} parent=1 // pred_check
      _
    $region27: #{tpu_custom_call.1} parent=1 // pred_check_branch
      %87 = sbr.rel (0) target = $region29
    $region28: #{tpu_custom_call.1} parent=1 // pred_region
      %89 = vsyncadd [#allocation11], 0
      %s90 = sshll.u32 %s7, 4
      %s91 = int_to_ptr.hbm [resolvable:$true] %s90
      %s92 = sshll.u32 [#allocation12], 4
      %s93 = int_to_ptr.vmem [resolvable:$true] %s92
      %98 = dma.hbm_to_vmem [thread:$0]  %s91, 2048, %s93, [#allocation11], 128, 128, 8
    $region29: #{tpu_custom_call.1} parent=1 // pred_fallthru
      _
    // Predicated region
    $region30: #{tpu_custom_call.1} parent=1 // pred_check
      _
    $region31: #{tpu_custom_call.1} parent=1 // pred_check_branch
      %100 = sbr.rel (0) target = $region33
    $region32: #{tpu_custom_call.1} parent=1 // pred_region
      %102 = vsyncadd [#allocation14], 0
      %s103 = sshll.u32 %s8, 4
      %s104 = int_to_ptr.hbm [resolvable:$true] %s103
      %s105 = sshll.u32 [#allocation13], 4
      %s106 = int_to_ptr.vmem [resolvable:$true] %s105
      %111 = dma.hbm_to_vmem [thread:$0]  %s104, 2048, %s106, [#allocation14], 128, 128, 8
    $region33: #{tpu_custom_call.1} parent=1 // pred_fallthru
      _
    // Predicated region
    $region34: #{tpu_custom_call.1} parent=1 // pred_check
      _
    $region35: #{tpu_custom_call.1} parent=1 // pred_check_branch
      %113 = sbr.rel (0) target = $region37
    $region36: #{tpu_custom_call.1} parent=1 // pred_region
      %115 = dma.done [#allocation5], 1024
    $region37: #{tpu_custom_call.1} parent=1 // pred_fallthru
      _
    // Predicated region
    $region38: #{tpu_custom_call.1} parent=1 // pred_check
      _
    $region39: #{tpu_custom_call.1} parent=1 // pred_check_branch
      %117 = sbr.rel (0) target = $region41
    $region40: #{tpu_custom_call.1} parent=1 // pred_region
      %119 = dma.done [#allocation8], 1024
    $region41: #{tpu_custom_call.1} parent=1 // pred_fallthru
      _
    // Predicated region
    $region42: #{tpu_custom_call.1} parent=1 // pred_check
      _
    $region43: #{tpu_custom_call.1} parent=1 // pred_check_branch
      %121 = sbr.rel (0) target = $region45
    $region44: #{tpu_custom_call.1} parent=1 // pred_region
      %123 = dma.done [#allocation8], 16384
    $region45: #{tpu_custom_call.1} parent=1 // pred_fallthru
      _
    // Predicated region
    $region46: #{tpu_custom_call.1} parent=1 // pred_check
      _
    $region47: #{tpu_custom_call.1} parent=1 // pred_check_branch
      %125 = sbr.rel (0) target = $region49
    $region48: #{tpu_custom_call.1} parent=1 // pred_region
      %127 = dma.done [#allocation11], 16384
    $region49: #{tpu_custom_call.1} parent=1 // pred_fallthru
      _
    // Predicated region
    $region50: #{tpu_custom_call.1} parent=1 // pred_check
      _
    $region51: #{tpu_custom_call.1} parent=1 // pred_check_branch
      %129 = sbr.rel (0) target = $region53
    $region52: #{tpu_custom_call.1} parent=1 // pred_region
      %131 = dma.done [#allocation11], 2048
    $region53: #{tpu_custom_call.1} parent=1 // pred_fallthru
      _
    // Predicated region
    $region54: #{tpu_custom_call.1} parent=1 // pred_check
      _
    $region55: #{tpu_custom_call.1} parent=1 // pred_check_branch
      %133 = sbr.rel (0) target = $region57
    $region56: #{tpu_custom_call.1} parent=1 // pred_region
      %135 = dma.done [#allocation14], 2048
    $region57: #{tpu_custom_call.1} parent=1 // pred_fallthru
      _
    %v136 = vld [vmem:[#allocation10] sm:$0xff]
    %v137 = vld [vmem:[#allocation10 + $0x8] sm:$0xff]
    %v138 = vld [vmem:[#allocation10 + $0x10] sm:$0xff]
    %v139 = vld [vmem:[#allocation10 + $0x18] sm:$0xff]
    %v140 = vld [vmem:[#allocation10 + $0x20] sm:$0xff]
    %v141 = vld [vmem:[#allocation10 + $0x28] sm:$0xff]
    %v142 = vld [vmem:[#allocation10 + $0x30] sm:$0xff]
    %v143 = vld [vmem:[#allocation10 + $0x38] sm:$0xff]
    %v144 = vld [vmem:[#allocation10 + $0x40] sm:$0xff]
    %v145 = vld [vmem:[#allocation10 + $0x48] sm:$0xff]
    %v146 = vld [vmem:[#allocation10 + $0x50] sm:$0xff]
    %v147 = vld [vmem:[#allocation10 + $0x58] sm:$0xff]
    %v148 = vld [vmem:[#allocation10 + $0x60] sm:$0xff]
    %v149 = vld [vmem:[#allocation10 + $0x68] sm:$0xff]
    %v150 = vld [vmem:[#allocation10 + $0x70] sm:$0xff]
    %v151 = vld [vmem:[#allocation10 + $0x78] sm:$0xff]
    %v152 = vld [vmem:[#allocation10 + $0x80] sm:$0xff]
    %v153 = vld [vmem:[#allocation10 + $0x88] sm:$0xff]
    %v154 = vld [vmem:[#allocation10 + $0x90] sm:$0xff]
    %v155 = vld [vmem:[#allocation10 + $0x98] sm:$0xff]
    %v156 = vld [vmem:[#allocation10 + $0xa0] sm:$0xff]
    %v157 = vld [vmem:[#allocation10 + $0xa8] sm:$0xff]
    %v158 = vld [vmem:[#allocation10 + $0xb0] sm:$0xff]
    %v159 = vld [vmem:[#allocation10 + $0xb8] sm:$0xff]
    %v160 = vld [vmem:[#allocation10 + $0xc0] sm:$0xff]
    %v161 = vld [vmem:[#allocation10 + $0xc8] sm:$0xff]
    %v162 = vld [vmem:[#allocation10 + $0xd0] sm:$0xff]
    %v163 = vld [vmem:[#allocation10 + $0xd8] sm:$0xff]
    %v164 = vld [vmem:[#allocation10 + $0xe0] sm:$0xff]
    %v165 = vld [vmem:[#allocation10 + $0xe8] sm:$0xff]
    %v166 = vld [vmem:[#allocation10 + $0xf0] sm:$0xff]
    %v167 = vld [vmem:[#allocation10 + $0xf8] sm:$0xff]
    %v168 = vld [vmem:[#allocation10 + $0x100] sm:$0xff]
    %v169 = vld [vmem:[#allocation10 + $0x108] sm:$0xff]
    %v170 = vld [vmem:[#allocation10 + $0x110] sm:$0xff]
    %v171 = vld [vmem:[#allocation10 + $0x118] sm:$0xff]
    %v172 = vld [vmem:[#allocation10 + $0x120] sm:$0xff]
    %v173 = vld [vmem:[#allocation10 + $0x128] sm:$0xff]
    %v174 = vld [vmem:[#allocation10 + $0x130] sm:$0xff]
    %v175 = vld [vmem:[#allocation10 + $0x138] sm:$0xff]
    %v176 = vld [vmem:[#allocation10 + $0x140] sm:$0xff]
    %v177 = vld [vmem:[#allocation10 + $0x148] sm:$0xff]
    %v178 = vld [vmem:[#allocation10 + $0x150] sm:$0xff]
    %v179 = vld [vmem:[#allocation10 + $0x158] sm:$0xff]
    %v180 = vld [vmem:[#allocation10 + $0x160] sm:$0xff]
    %v181 = vld [vmem:[#allocation10 + $0x168] sm:$0xff]
    %v182 = vld [vmem:[#allocation10 + $0x170] sm:$0xff]
    %v183 = vld [vmem:[#allocation10 + $0x178] sm:$0xff]
    %v184 = vld [vmem:[#allocation10 + $0x180] sm:$0xff]
    %v185 = vld [vmem:[#allocation10 + $0x188] sm:$0xff]
    %v186 = vld [vmem:[#allocation10 + $0x190] sm:$0xff]
    %v187 = vld [vmem:[#allocation10 + $0x198] sm:$0xff]
    %v188 = vld [vmem:[#allocation10 + $0x1a0] sm:$0xff]
    %v189 = vld [vmem:[#allocation10 + $0x1a8] sm:$0xff]
    %v190 = vld [vmem:[#allocation10 + $0x1b0] sm:$0xff]
    %v191 = vld [vmem:[#allocation10 + $0x1b8] sm:$0xff]
    %v192 = vld [vmem:[#allocation10 + $0x1c0] sm:$0xff]
    %v193 = vld [vmem:[#allocation10 + $0x1c8] sm:$0xff]
    %v194 = vld [vmem:[#allocation10 + $0x1d0] sm:$0xff]
    %v195 = vld [vmem:[#allocation10 + $0x1d8] sm:$0xff]
    %v196 = vld [vmem:[#allocation10 + $0x1e0] sm:$0xff]
    %v197 = vld [vmem:[#allocation10 + $0x1e8] sm:$0xff]
    %v198 = vld [vmem:[#allocation10 + $0x1f0] sm:$0xff]
    %v199 = vld [vmem:[#allocation10 + $0x1f8] sm:$0xff]
    %v200 = vld [vmem:[#allocation10 + $0x200] sm:$0xff]
    %v201 = vld [vmem:[#allocation10 + $0x208] sm:$0xff]
    %v202 = vld [vmem:[#allocation10 + $0x210] sm:$0xff]
    %v203 = vld [vmem:[#allocation10 + $0x218] sm:$0xff]
    %v204 = vld [vmem:[#allocation10 + $0x220] sm:$0xff]
    %v205 = vld [vmem:[#allocation10 + $0x228] sm:$0xff]
    %v206 = vld [vmem:[#allocation10 + $0x230] sm:$0xff]
    %v207 = vld [vmem:[#allocation10 + $0x238] sm:$0xff]
    %v208 = vld [vmem:[#allocation10 + $0x240] sm:$0xff]
    %v209 = vld [vmem:[#allocation10 + $0x248] sm:$0xff]
    %v210 = vld [vmem:[#allocation10 + $0x250] sm:$0xff]
    %v211 = vld [vmem:[#allocation10 + $0x258] sm:$0xff]
    %v212 = vld [vmem:[#allocation10 + $0x260] sm:$0xff]
    %v213 = vld [vmem:[#allocation10 + $0x268] sm:$0xff]
    %v214 = vld [vmem:[#allocation10 + $0x270] sm:$0xff]
    %v215 = vld [vmem:[#allocation10 + $0x278] sm:$0xff]
    %v216 = vld [vmem:[#allocation10 + $0x280] sm:$0xff]
    %v217 = vld [vmem:[#allocation10 + $0x288] sm:$0xff]
    %v218 = vld [vmem:[#allocation10 + $0x290] sm:$0xff]
    %v219 = vld [vmem:[#allocation10 + $0x298] sm:$0xff]
    %v220 = vld [vmem:[#allocation10 + $0x2a0] sm:$0xff]
    %v221 = vld [vmem:[#allocation10 + $0x2a8] sm:$0xff]
    %v222 = vld [vmem:[#allocation10 + $0x2b0] sm:$0xff]
    %v223 = vld [vmem:[#allocation10 + $0x2b8] sm:$0xff]
    %v224 = vld [vmem:[#allocation10 + $0x2c0] sm:$0xff]
    %v225 = vld [vmem:[#allocation10 + $0x2c8] sm:$0xff]
    %v226 = vld [vmem:[#allocation10 + $0x2d0] sm:$0xff]
    %v227 = vld [vmem:[#allocation10 + $0x2d8] sm:$0xff]
    %v228 = vld [vmem:[#allocation10 + $0x2e0] sm:$0xff]
    %v229 = vld [vmem:[#allocation10 + $0x2e8] sm:$0xff]
    %v230 = vld [vmem:[#allocation10 + $0x2f0] sm:$0xff]
    %v231 = vld [vmem:[#allocation10 + $0x2f8] sm:$0xff]
    %v232 = vld [vmem:[#allocation10 + $0x300] sm:$0xff]
    %v233 = vld [vmem:[#allocation10 + $0x308] sm:$0xff]
    %v234 = vld [vmem:[#allocation10 + $0x310] sm:$0xff]
    %v235 = vld [vmem:[#allocation10 + $0x318] sm:$0xff]
    %v236 = vld [vmem:[#allocation10 + $0x320] sm:$0xff]
    %v237 = vld [vmem:[#allocation10 + $0x328] sm:$0xff]
    %v238 = vld [vmem:[#allocation10 + $0x330] sm:$0xff]
    %v239 = vld [vmem:[#allocation10 + $0x338] sm:$0xff]
    %v240 = vld [vmem:[#allocation10 + $0x340] sm:$0xff]
    %v241 = vld [vmem:[#allocation10 + $0x348] sm:$0xff]
    %v242 = vld [vmem:[#allocation10 + $0x350] sm:$0xff]
    %v243 = vld [vmem:[#allocation10 + $0x358] sm:$0xff]
    %v244 = vld [vmem:[#allocation10 + $0x360] sm:$0xff]
    %v245 = vld [vmem:[#allocation10 + $0x368] sm:$0xff]
    %v246 = vld [vmem:[#allocation10 + $0x370] sm:$0xff]
    %v247 = vld [vmem:[#allocation10 + $0x378] sm:$0xff]
    %v248 = vld [vmem:[#allocation10 + $0x380] sm:$0xff]
    %v249 = vld [vmem:[#allocation10 + $0x388] sm:$0xff]
    %v250 = vld [vmem:[#allocation10 + $0x390] sm:$0xff]
    %v251 = vld [vmem:[#allocation10 + $0x398] sm:$0xff]
    %v252 = vld [vmem:[#allocation10 + $0x3a0] sm:$0xff]
    %v253 = vld [vmem:[#allocation10 + $0x3a8] sm:$0xff]
    %v254 = vld [vmem:[#allocation10 + $0x3b0] sm:$0xff]
    %v255 = vld [vmem:[#allocation10 + $0x3b8] sm:$0xff]
    %v256 = vld [vmem:[#allocation10 + $0x3c0] sm:$0xff]
    %v257 = vld [vmem:[#allocation10 + $0x3c8] sm:$0xff]
    %v258 = vld [vmem:[#allocation10 + $0x3d0] sm:$0xff]
    %v259 = vld [vmem:[#allocation10 + $0x3d8] sm:$0xff]
    %v260 = vld [vmem:[#allocation10 + $0x3e0] sm:$0xff]
    %v261 = vld [vmem:[#allocation10 + $0x3e8] sm:$0xff]
    %v262 = vld [vmem:[#allocation10 + $0x3f0] sm:$0xff]
    %v263 = vld [vmem:[#allocation10 + $0x3f8] sm:$0xff]
    %v264 = vmul.f32 %v136, 0.999
    %v265 = vmul.f32 %v137, 0.999
    %v266 = vmul.f32 %v138, 0.999
    %v267 = vmul.f32 %v139, 0.999
    %v268 = vmul.f32 %v140, 0.999
    %v269 = vmul.f32 %v141, 0.999
    %v270 = vmul.f32 %v142, 0.999
    %v271 = vmul.f32 %v143, 0.999
    %v272 = vmul.f32 %v144, 0.999
    %v273 = vmul.f32 %v145, 0.999
    %v274 = vmul.f32 %v146, 0.999
    %v275 = vmul.f32 %v147, 0.999
    %v276 = vmul.f32 %v148, 0.999
    %v277 = vmul.f32 %v149, 0.999
    %v278 = vmul.f32 %v150, 0.999
    %v279 = vmul.f32 %v151, 0.999
    %v280 = vmul.f32 %v152, 0.999
    %v281 = vmul.f32 %v153, 0.999
    %v282 = vmul.f32 %v154, 0.999
    %v283 = vmul.f32 %v155, 0.999
    %v284 = vmul.f32 %v156, 0.999
    %v285 = vmul.f32 %v157, 0.999
    %v286 = vmul.f32 %v158, 0.999
    %v287 = vmul.f32 %v159, 0.999
    %v288 = vmul.f32 %v160, 0.999
    %v289 = vmul.f32 %v161, 0.999
    %v290 = vmul.f32 %v162, 0.999
    %v291 = vmul.f32 %v163, 0.999
    %v292 = vmul.f32 %v164, 0.999
    %v293 = vmul.f32 %v165, 0.999
    %v294 = vmul.f32 %v166, 0.999
    %v295 = vmul.f32 %v167, 0.999
    %v296 = vmul.f32 %v168, 0.999
    %v297 = vmul.f32 %v169, 0.999
    %v298 = vmul.f32 %v170, 0.999
    %v299 = vmul.f32 %v171, 0.999
    %v300 = vmul.f32 %v172, 0.999
    %v301 = vmul.f32 %v173, 0.999
    %v302 = vmul.f32 %v174, 0.999
    %v303 = vmul.f32 %v175, 0.999
    %v304 = vmul.f32 %v176, 0.999
    %v305 = vmul.f32 %v177, 0.999
    %v306 = vmul.f32 %v178, 0.999
    %v307 = vmul.f32 %v179, 0.999
    %v308 = vmul.f32 %v180, 0.999
    %v309 = vmul.f32 %v181, 0.999
    %v310 = vmul.f32 %v182, 0.999
    %v311 = vmul.f32 %v183, 0.999
    %v312 = vmul.f32 %v184, 0.999
    %v313 = vmul.f32 %v185, 0.999
    %v314 = vmul.f32 %v186, 0.999
    %v315 = vmul.f32 %v187, 0.999
    %v316 = vmul.f32 %v188, 0.999
    %v317 = vmul.f32 %v189, 0.999
    %v318 = vmul.f32 %v190, 0.999
    %v319 = vmul.f32 %v191, 0.999
    %v320 = vmul.f32 %v192, 0.999
    %v321 = vmul.f32 %v193, 0.999
    %v322 = vmul.f32 %v194, 0.999
    %v323 = vmul.f32 %v195, 0.999
    %v324 = vmul.f32 %v196, 0.999
    %v325 = vmul.f32 %v197, 0.999
    %v326 = vmul.f32 %v198, 0.999
    %v327 = vmul.f32 %v199, 0.999
    %v328 = vmul.f32 %v200, 0.999
    %v329 = vmul.f32 %v201, 0.999
    %v330 = vmul.f32 %v202, 0.999
    %v331 = vmul.f32 %v203, 0.999
    %v332 = vmul.f32 %v204, 0.999
    %v333 = vmul.f32 %v205, 0.999
    %v334 = vmul.f32 %v206, 0.999
    %v335 = vmul.f32 %v207, 0.999
    %v336 = vmul.f32 %v208, 0.999
    %v337 = vmul.f32 %v209, 0.999
    %v338 = vmul.f32 %v210, 0.999
    %v339 = vmul.f32 %v211, 0.999
    %v340 = vmul.f32 %v212, 0.999
    %v341 = vmul.f32 %v213, 0.999
    %v342 = vmul.f32 %v214, 0.999
    %v343 = vmul.f32 %v215, 0.999
    %v344 = vmul.f32 %v216, 0.999
    %v345 = vmul.f32 %v217, 0.999
    %v346 = vmul.f32 %v218, 0.999
    %v347 = vmul.f32 %v219, 0.999
    %v348 = vmul.f32 %v220, 0.999
    %v349 = vmul.f32 %v221, 0.999
    %v350 = vmul.f32 %v222, 0.999
    %v351 = vmul.f32 %v223, 0.999
    %v352 = vmul.f32 %v224, 0.999
    %v353 = vmul.f32 %v225, 0.999
    %v354 = vmul.f32 %v226, 0.999
    %v355 = vmul.f32 %v227, 0.999
    %v356 = vmul.f32 %v228, 0.999
    %v357 = vmul.f32 %v229, 0.999
    %v358 = vmul.f32 %v230, 0.999
    %v359 = vmul.f32 %v231, 0.999
    %v360 = vmul.f32 %v232, 0.999
    %v361 = vmul.f32 %v233, 0.999
    %v362 = vmul.f32 %v234, 0.999
    %v363 = vmul.f32 %v235, 0.999
    %v364 = vmul.f32 %v236, 0.999
    %v365 = vmul.f32 %v237, 0.999
    %v366 = vmul.f32 %v238, 0.999
    %v367 = vmul.f32 %v239, 0.999
    %v368 = vmul.f32 %v240, 0.999
    %v369 = vmul.f32 %v241, 0.999
    %v370 = vmul.f32 %v242, 0.999
    %v371 = vmul.f32 %v243, 0.999
    %v372 = vmul.f32 %v244, 0.999
    %v373 = vmul.f32 %v245, 0.999
    %v374 = vmul.f32 %v246, 0.999
    %v375 = vmul.f32 %v247, 0.999
    %v376 = vmul.f32 %v248, 0.999
    %v377 = vmul.f32 %v249, 0.999
    %v378 = vmul.f32 %v250, 0.999
    %v379 = vmul.f32 %v251, 0.999
    %v380 = vmul.f32 %v252, 0.999
    %v381 = vmul.f32 %v253, 0.999
    %v382 = vmul.f32 %v254, 0.999
    %v383 = vmul.f32 %v255, 0.999
    %v384 = vmul.f32 %v256, 0.999
    %v385 = vmul.f32 %v257, 0.999
    %v386 = vmul.f32 %v258, 0.999
    %v387 = vmul.f32 %v259, 0.999
    %v388 = vmul.f32 %v260, 0.999
    %v389 = vmul.f32 %v261, 0.999
    %v390 = vmul.f32 %v262, 0.999
    %v391 = vmul.f32 %v263, 0.999
    %v392 = vld [vmem:[#allocation9] sm:$0xff]
    %v393 = vld [vmem:[#allocation9 + $0x8] sm:$0xff]
    %v394 = vld [vmem:[#allocation9 + $0x10] sm:$0xff]
    %v395 = vld [vmem:[#allocation9 + $0x18] sm:$0xff]
    %v396 = vld [vmem:[#allocation9 + $0x20] sm:$0xff]
    %v397 = vld [vmem:[#allocation9 + $0x28] sm:$0xff]
    %v398 = vld [vmem:[#allocation9 + $0x30] sm:$0xff]
    %v399 = vld [vmem:[#allocation9 + $0x38] sm:$0xff]
    %v400 = vld [vmem:[#allocation9 + $0x40] sm:$0xff]
    %v401 = vld [vmem:[#allocation9 + $0x48] sm:$0xff]
    %v402 = vld [vmem:[#allocation9 + $0x50] sm:$0xff]
    %v403 = vld [vmem:[#allocation9 + $0x58] sm:$0xff]
    %v404 = vld [vmem:[#allocation9 + $0x60] sm:$0xff]
    %v405 = vld [vmem:[#allocation9 + $0x68] sm:$0xff]
    %v406 = vld [vmem:[#allocation9 + $0x70] sm:$0xff]
    %v407 = vld [vmem:[#allocation9 + $0x78] sm:$0xff]
    %v408 = vld [vmem:[#allocation9 + $0x80] sm:$0xff]
    %v409 = vld [vmem:[#allocation9 + $0x88] sm:$0xff]
    %v410 = vld [vmem:[#allocation9 + $0x90] sm:$0xff]
    %v411 = vld [vmem:[#allocation9 + $0x98] sm:$0xff]
    %v412 = vld [vmem:[#allocation9 + $0xa0] sm:$0xff]
    %v413 = vld [vmem:[#allocation9 + $0xa8] sm:$0xff]
    %v414 = vld [vmem:[#allocation9 + $0xb0] sm:$0xff]
    %v415 = vld [vmem:[#allocation9 + $0xb8] sm:$0xff]
    %v416 = vld [vmem:[#allocation9 + $0xc0] sm:$0xff]
    %v417 = vld [vmem:[#allocation9 + $0xc8] sm:$0xff]
    %v418 = vld [vmem:[#allocation9 + $0xd0] sm:$0xff]
    %v419 = vld [vmem:[#allocation9 + $0xd8] sm:$0xff]
    %v420 = vld [vmem:[#allocation9 + $0xe0] sm:$0xff]
    %v421 = vld [vmem:[#allocation9 + $0xe8] sm:$0xff]
    %v422 = vld [vmem:[#allocation9 + $0xf0] sm:$0xff]
    %v423 = vld [vmem:[#allocation9 + $0xf8] sm:$0xff]
    %v424 = vld [vmem:[#allocation9 + $0x100] sm:$0xff]
    %v425 = vld [vmem:[#allocation9 + $0x108] sm:$0xff]
    %v426 = vld [vmem:[#allocation9 + $0x110] sm:$0xff]
    %v427 = vld [vmem:[#allocation9 + $0x118] sm:$0xff]
    %v428 = vld [vmem:[#allocation9 + $0x120] sm:$0xff]
    %v429 = vld [vmem:[#allocation9 + $0x128] sm:$0xff]
    %v430 = vld [vmem:[#allocation9 + $0x130] sm:$0xff]
    %v431 = vld [vmem:[#allocation9 + $0x138] sm:$0xff]
    %v432 = vld [vmem:[#allocation9 + $0x140] sm:$0xff]
    %v433 = vld [vmem:[#allocation9 + $0x148] sm:$0xff]
    %v434 = vld [vmem:[#allocation9 + $0x150] sm:$0xff]
    %v435 = vld [vmem:[#allocation9 + $0x158] sm:$0xff]
    %v436 = vld [vmem:[#allocation9 + $0x160] sm:$0xff]
    %v437 = vld [vmem:[#allocation9 + $0x168] sm:$0xff]
    %v438 = vld [vmem:[#allocation9 + $0x170] sm:$0xff]
    %v439 = vld [vmem:[#allocation9 + $0x178] sm:$0xff]
    %v440 = vld [vmem:[#allocation9 + $0x180] sm:$0xff]
    %v441 = vld [vmem:[#allocation9 + $0x188] sm:$0xff]
    %v442 = vld [vmem:[#allocation9 + $0x190] sm:$0xff]
    %v443 = vld [vmem:[#allocation9 + $0x198] sm:$0xff]
    %v444 = vld [vmem:[#allocation9 + $0x1a0] sm:$0xff]
    %v445 = vld [vmem:[#allocation9 + $0x1a8] sm:$0xff]
    %v446 = vld [vmem:[#allocation9 + $0x1b0] sm:$0xff]
    %v447 = vld [vmem:[#allocation9 + $0x1b8] sm:$0xff]
    %v448 = vld [vmem:[#allocation9 + $0x1c0] sm:$0xff]
    %v449 = vld [vmem:[#allocation9 + $0x1c8] sm:$0xff]
    %v450 = vld [vmem:[#allocation9 + $0x1d0] sm:$0xff]
    %v451 = vld [vmem:[#allocation9 + $0x1d8] sm:$0xff]
    %v452 = vld [vmem:[#allocation9 + $0x1e0] sm:$0xff]
    %v453 = vld [vmem:[#allocation9 + $0x1e8] sm:$0xff]
    %v454 = vld [vmem:[#allocation9 + $0x1f0] sm:$0xff]
    %v455 = vld [vmem:[#allocation9 + $0x1f8] sm:$0xff]
    %v456 = vld [vmem:[#allocation9 + $0x200] sm:$0xff]
    %v457 = vld [vmem:[#allocation9 + $0x208] sm:$0xff]
    %v458 = vld [vmem:[#allocation9 + $0x210] sm:$0xff]
    %v459 = vld [vmem:[#allocation9 + $0x218] sm:$0xff]
    %v460 = vld [vmem:[#allocation9 + $0x220] sm:$0xff]
    %v461 = vld [vmem:[#allocation9 + $0x228] sm:$0xff]
    %v462 = vld [vmem:[#allocation9 + $0x230] sm:$0xff]
    %v463 = vld [vmem:[#allocation9 + $0x238] sm:$0xff]
    %v464 = vld [vmem:[#allocation9 + $0x240] sm:$0xff]
    %v465 = vld [vmem:[#allocation9 + $0x248] sm:$0xff]
    %v466 = vld [vmem:[#allocation9 + $0x250] sm:$0xff]
    %v467 = vld [vmem:[#allocation9 + $0x258] sm:$0xff]
    %v468 = vld [vmem:[#allocation9 + $0x260] sm:$0xff]
    %v469 = vld [vmem:[#allocation9 + $0x268] sm:$0xff]
    %v470 = vld [vmem:[#allocation9 + $0x270] sm:$0xff]
    %v471 = vld [vmem:[#allocation9 + $0x278] sm:$0xff]
    %v472 = vld [vmem:[#allocation9 + $0x280] sm:$0xff]
    %v473 = vld [vmem:[#allocation9 + $0x288] sm:$0xff]
    %v474 = vld [vmem:[#allocation9 + $0x290] sm:$0xff]
    %v475 = vld [vmem:[#allocation9 + $0x298] sm:$0xff]
    %v476 = vld [vmem:[#allocation9 + $0x2a0] sm:$0xff]
    %v477 = vld [vmem:[#allocation9 + $0x2a8] sm:$0xff]
    %v478 = vld [vmem:[#allocation9 + $0x2b0] sm:$0xff]
    %v479 = vld [vmem:[#allocation9 + $0x2b8] sm:$0xff]
    %v480 = vld [vmem:[#allocation9 + $0x2c0] sm:$0xff]
    %v481 = vld [vmem:[#allocation9 + $0x2c8] sm:$0xff]
    %v482 = vld [vmem:[#allocation9 + $0x2d0] sm:$0xff]
    %v483 = vld [vmem:[#allocation9 + $0x2d8] sm:$0xff]
    %v484 = vld [vmem:[#allocation9 + $0x2e0] sm:$0xff]
    %v485 = vld [vmem:[#allocation9 + $0x2e8] sm:$0xff]
    %v486 = vld [vmem:[#allocation9 + $0x2f0] sm:$0xff]
    %v487 = vld [vmem:[#allocation9 + $0x2f8] sm:$0xff]
    %v488 = vld [vmem:[#allocation9 + $0x300] sm:$0xff]
    %v489 = vld [vmem:[#allocation9 + $0x308] sm:$0xff]
    %v490 = vld [vmem:[#allocation9 + $0x310] sm:$0xff]
    %v491 = vld [vmem:[#allocation9 + $0x318] sm:$0xff]
    %v492 = vld [vmem:[#allocation9 + $0x320] sm:$0xff]
    %v493 = vld [vmem:[#allocation9 + $0x328] sm:$0xff]
    %v494 = vld [vmem:[#allocation9 + $0x330] sm:$0xff]
    %v495 = vld [vmem:[#allocation9 + $0x338] sm:$0xff]
    %v496 = vld [vmem:[#allocation9 + $0x340] sm:$0xff]
    %v497 = vld [vmem:[#allocation9 + $0x348] sm:$0xff]
    %v498 = vld [vmem:[#allocation9 + $0x350] sm:$0xff]
    %v499 = vld [vmem:[#allocation9 + $0x358] sm:$0xff]
    %v500 = vld [vmem:[#allocation9 + $0x360] sm:$0xff]
    %v501 = vld [vmem:[#allocation9 + $0x368] sm:$0xff]
    %v502 = vld [vmem:[#allocation9 + $0x370] sm:$0xff]
    %v503 = vld [vmem:[#allocation9 + $0x378] sm:$0xff]
    %v504 = vld [vmem:[#allocation9 + $0x380] sm:$0xff]
    %v505 = vld [vmem:[#allocation9 + $0x388] sm:$0xff]
    %v506 = vld [vmem:[#allocation9 + $0x390] sm:$0xff]
    %v507 = vld [vmem:[#allocation9 + $0x398] sm:$0xff]
    %v508 = vld [vmem:[#allocation9 + $0x3a0] sm:$0xff]
    %v509 = vld [vmem:[#allocation9 + $0x3a8] sm:$0xff]
    %v510 = vld [vmem:[#allocation9 + $0x3b0] sm:$0xff]
    %v511 = vld [vmem:[#allocation9 + $0x3b8] sm:$0xff]
    %v512 = vld [vmem:[#allocation9 + $0x3c0] sm:$0xff]
    %v513 = vld [vmem:[#allocation9 + $0x3c8] sm:$0xff]
    %v514 = vld [vmem:[#allocation9 + $0x3d0] sm:$0xff]
    %v515 = vld [vmem:[#allocation9 + $0x3d8] sm:$0xff]
    %v516 = vld [vmem:[#allocation9 + $0x3e0] sm:$0xff]
    %v517 = vld [vmem:[#allocation9 + $0x3e8] sm:$0xff]
    %v518 = vld [vmem:[#allocation9 + $0x3f0] sm:$0xff]
    %v519 = vld [vmem:[#allocation9 + $0x3f8] sm:$0xff]
    %v520 = vmul.f32 %v392, 0.001
    %v521 = vmul.f32 %v393, 0.001
    %v522 = vmul.f32 %v394, 0.001
    %v523 = vmul.f32 %v395, 0.001
    %v524 = vmul.f32 %v396, 0.001
    %v525 = vmul.f32 %v397, 0.001
    %v526 = vmul.f32 %v398, 0.001
    %v527 = vmul.f32 %v399, 0.001
    %v528 = vmul.f32 %v400, 0.001
    %v529 = vmul.f32 %v401, 0.001
    %v530 = vmul.f32 %v402, 0.001
    %v531 = vmul.f32 %v403, 0.001
    %v532 = vmul.f32 %v404, 0.001
    %v533 = vmul.f32 %v405, 0.001
    %v534 = vmul.f32 %v406, 0.001
    %v535 = vmul.f32 %v407, 0.001
    %v536 = vmul.f32 %v408, 0.001
    %v537 = vmul.f32 %v409, 0.001
    %v538 = vmul.f32 %v410, 0.001
    %v539 = vmul.f32 %v411, 0.001
    %v540 = vmul.f32 %v412, 0.001
    %v541 = vmul.f32 %v413, 0.001
    %v542 = vmul.f32 %v414, 0.001
    %v543 = vmul.f32 %v415, 0.001
    %v544 = vmul.f32 %v416, 0.001
    %v545 = vmul.f32 %v417, 0.001
    %v546 = vmul.f32 %v418, 0.001
    %v547 = vmul.f32 %v419, 0.001
    %v548 = vmul.f32 %v420, 0.001
    %v549 = vmul.f32 %v421, 0.001
    %v550 = vmul.f32 %v422, 0.001
    %v551 = vmul.f32 %v423, 0.001
    %v552 = vmul.f32 %v424, 0.001
    %v553 = vmul.f32 %v425, 0.001
    %v554 = vmul.f32 %v426, 0.001
    %v555 = vmul.f32 %v427, 0.001
    %v556 = vmul.f32 %v428, 0.001
    %v557 = vmul.f32 %v429, 0.001
    %v558 = vmul.f32 %v430, 0.001
    %v559 = vmul.f32 %v431, 0.001
    %v560 = vmul.f32 %v432, 0.001
    %v561 = vmul.f32 %v433, 0.001
    %v562 = vmul.f32 %v434, 0.001
    %v563 = vmul.f32 %v435, 0.001
    %v564 = vmul.f32 %v436, 0.001
    %v565 = vmul.f32 %v437, 0.001
    %v566 = vmul.f32 %v438, 0.001
    %v567 = vmul.f32 %v439, 0.001
    %v568 = vmul.f32 %v440, 0.001
    %v569 = vmul.f32 %v441, 0.001
    %v570 = vmul.f32 %v442, 0.001
    %v571 = vmul.f32 %v443, 0.001
    %v572 = vmul.f32 %v444, 0.001
    %v573 = vmul.f32 %v445, 0.001
    %v574 = vmul.f32 %v446, 0.001
    %v575 = vmul.f32 %v447, 0.001
    %v576 = vmul.f32 %v448, 0.001
    %v577 = vmul.f32 %v449, 0.001
    %v578 = vmul.f32 %v450, 0.001
    %v579 = vmul.f32 %v451, 0.001
    %v580 = vmul.f32 %v452, 0.001
    %v581 = vmul.f32 %v453, 0.001
    %v582 = vmul.f32 %v454, 0.001
    %v583 = vmul.f32 %v455, 0.001
    %v584 = vmul.f32 %v456, 0.001
    %v585 = vmul.f32 %v457, 0.001
    %v586 = vmul.f32 %v458, 0.001
    %v587 = vmul.f32 %v459, 0.001
    %v588 = vmul.f32 %v460, 0.001
    %v589 = vmul.f32 %v461, 0.001
    %v590 = vmul.f32 %v462, 0.001
    %v591 = vmul.f32 %v463, 0.001
    %v592 = vmul.f32 %v464, 0.001
    %v593 = vmul.f32 %v465, 0.001
    %v594 = vmul.f32 %v466, 0.001
    %v595 = vmul.f32 %v467, 0.001
    %v596 = vmul.f32 %v468, 0.001
    %v597 = vmul.f32 %v469, 0.001
    %v598 = vmul.f32 %v470, 0.001
    %v599 = vmul.f32 %v471, 0.001
    %v600 = vmul.f32 %v472, 0.001
    %v601 = vmul.f32 %v473, 0.001
    %v602 = vmul.f32 %v474, 0.001
    %v603 = vmul.f32 %v475, 0.001
    %v604 = vmul.f32 %v476, 0.001
    %v605 = vmul.f32 %v477, 0.001
    %v606 = vmul.f32 %v478, 0.001
    %v607 = vmul.f32 %v479, 0.001
    %v608 = vmul.f32 %v480, 0.001
    %v609 = vmul.f32 %v481, 0.001
    %v610 = vmul.f32 %v482, 0.001
    %v611 = vmul.f32 %v483, 0.001
    %v612 = vmul.f32 %v484, 0.001
    %v613 = vmul.f32 %v485, 0.001
    %v614 = vmul.f32 %v486, 0.001
    %v615 = vmul.f32 %v487, 0.001
    %v616 = vmul.f32 %v488, 0.001
    %v617 = vmul.f32 %v489, 0.001
    %v618 = vmul.f32 %v490, 0.001
    %v619 = vmul.f32 %v491, 0.001
    %v620 = vmul.f32 %v492, 0.001
    %v621 = vmul.f32 %v493, 0.001
    %v622 = vmul.f32 %v494, 0.001
    %v623 = vmul.f32 %v495, 0.001
    %v624 = vmul.f32 %v496, 0.001
    %v625 = vmul.f32 %v497, 0.001
    %v626 = vmul.f32 %v498, 0.001
    %v627 = vmul.f32 %v499, 0.001
    %v628 = vmul.f32 %v500, 0.001
    %v629 = vmul.f32 %v501, 0.001
    %v630 = vmul.f32 %v502, 0.001
    %v631 = vmul.f32 %v503, 0.001
    %v632 = vmul.f32 %v504, 0.001
    %v633 = vmul.f32 %v505, 0.001
    %v634 = vmul.f32 %v506, 0.001
    %v635 = vmul.f32 %v507, 0.001
    %v636 = vmul.f32 %v508, 0.001
    %v637 = vmul.f32 %v509, 0.001
    %v638 = vmul.f32 %v510, 0.001
    %v639 = vmul.f32 %v511, 0.001
    %v640 = vmul.f32 %v512, 0.001
    %v641 = vmul.f32 %v513, 0.001
    %v642 = vmul.f32 %v514, 0.001
    %v643 = vmul.f32 %v515, 0.001
    %v644 = vmul.f32 %v516, 0.001
    %v645 = vmul.f32 %v517, 0.001
    %v646 = vmul.f32 %v518, 0.001
    %v647 = vmul.f32 %v519, 0.001
    %v648 = vadd.f32 %v264, %v520
    %v649 = vadd.f32 %v265, %v521
    %v650 = vadd.f32 %v266, %v522
    %v651 = vadd.f32 %v267, %v523
    %v652 = vadd.f32 %v268, %v524
    %v653 = vadd.f32 %v269, %v525
    %v654 = vadd.f32 %v270, %v526
    %v655 = vadd.f32 %v271, %v527
    %v656 = vadd.f32 %v272, %v528
    %v657 = vadd.f32 %v273, %v529
    %v658 = vadd.f32 %v274, %v530
    %v659 = vadd.f32 %v275, %v531
    %v660 = vadd.f32 %v276, %v532
    %v661 = vadd.f32 %v277, %v533
    %v662 = vadd.f32 %v278, %v534
    %v663 = vadd.f32 %v279, %v535
    %v664 = vadd.f32 %v280, %v536
    %v665 = vadd.f32 %v281, %v537
    %v666 = vadd.f32 %v282, %v538
    %v667 = vadd.f32 %v283, %v539
    %v668 = vadd.f32 %v284, %v540
    %v669 = vadd.f32 %v285, %v541
    %v670 = vadd.f32 %v286, %v542
    %v671 = vadd.f32 %v287, %v543
    %v672 = vadd.f32 %v288, %v544
    %v673 = vadd.f32 %v289, %v545
    %v674 = vadd.f32 %v290, %v546
    %v675 = vadd.f32 %v291, %v547
    %v676 = vadd.f32 %v292, %v548
    %v677 = vadd.f32 %v293, %v549
    %v678 = vadd.f32 %v294, %v550
    %v679 = vadd.f32 %v295, %v551
    %v680 = vadd.f32 %v296, %v552
    %v681 = vadd.f32 %v297, %v553
    %v682 = vadd.f32 %v298, %v554
    %v683 = vadd.f32 %v299, %v555
    %v684 = vadd.f32 %v300, %v556
    %v685 = vadd.f32 %v301, %v557
    %v686 = vadd.f32 %v302, %v558
    %v687 = vadd.f32 %v303, %v559
    %v688 = vadd.f32 %v304, %v560
    %v689 = vadd.f32 %v305, %v561
    %v690 = vadd.f32 %v306, %v562
    %v691 = vadd.f32 %v307, %v563
    %v692 = vadd.f32 %v308, %v564
    %v693 = vadd.f32 %v309, %v565
    %v694 = vadd.f32 %v310, %v566
    %v695 = vadd.f32 %v311, %v567
    %v696 = vadd.f32 %v312, %v568
    %v697 = vadd.f32 %v313, %v569
    %v698 = vadd.f32 %v314, %v570
    %v699 = vadd.f32 %v315, %v571
    %v700 = vadd.f32 %v316, %v572
    %v701 = vadd.f32 %v317, %v573
    %v702 = vadd.f32 %v318, %v574
    %v703 = vadd.f32 %v319, %v575
    %v704 = vadd.f32 %v320, %v576
    %v705 = vadd.f32 %v321, %v577
    %v706 = vadd.f32 %v322, %v578
    %v707 = vadd.f32 %v323, %v579
    %v708 = vadd.f32 %v324, %v580
    %v709 = vadd.f32 %v325, %v581
    %v710 = vadd.f32 %v326, %v582
    %v711 = vadd.f32 %v327, %v583
    %v712 = vadd.f32 %v328, %v584
    %v713 = vadd.f32 %v329, %v585
    %v714 = vadd.f32 %v330, %v586
    %v715 = vadd.f32 %v331, %v587
    %v716 = vadd.f32 %v332, %v588
    %v717 = vadd.f32 %v333, %v589
    %v718 = vadd.f32 %v334, %v590
    %v719 = vadd.f32 %v335, %v591
    %v720 = vadd.f32 %v336, %v592
    %v721 = vadd.f32 %v337, %v593
    %v722 = vadd.f32 %v338, %v594
    %v723 = vadd.f32 %v339, %v595
    %v724 = vadd.f32 %v340, %v596
    %v725 = vadd.f32 %v341, %v597
    %v726 = vadd.f32 %v342, %v598
    %v727 = vadd.f32 %v343, %v599
    %v728 = vadd.f32 %v344, %v600
    %v729 = vadd.f32 %v345, %v601
    %v730 = vadd.f32 %v346, %v602
    %v731 = vadd.f32 %v347, %v603
    %v732 = vadd.f32 %v348, %v604
    %v733 = vadd.f32 %v349, %v605
    %v734 = vadd.f32 %v350, %v606
    %v735 = vadd.f32 %v351, %v607
    %v736 = vadd.f32 %v352, %v608
    %v737 = vadd.f32 %v353, %v609
    %v738 = vadd.f32 %v354, %v610
    %v739 = vadd.f32 %v355, %v611
    %v740 = vadd.f32 %v356, %v612
    %v741 = vadd.f32 %v357, %v613
    %v742 = vadd.f32 %v358, %v614
    %v743 = vadd.f32 %v359, %v615
    %v744 = vadd.f32 %v360, %v616
    %v745 = vadd.f32 %v361, %v617
    %v746 = vadd.f32 %v362, %v618
    %v747 = vadd.f32 %v363, %v619
    %v748 = vadd.f32 %v364, %v620
    %v749 = vadd.f32 %v365, %v621
    %v750 = vadd.f32 %v366, %v622
    %v751 = vadd.f32 %v367, %v623
    %v752 = vadd.f32 %v368, %v624
    %v753 = vadd.f32 %v369, %v625
    %v754 = vadd.f32 %v370, %v626
    %v755 = vadd.f32 %v371, %v627
    %v756 = vadd.f32 %v372, %v628
    %v757 = vadd.f32 %v373, %v629
    %v758 = vadd.f32 %v374, %v630
    %v759 = vadd.f32 %v375, %v631
    %v760 = vadd.f32 %v376, %v632
    %v761 = vadd.f32 %v377, %v633
    %v762 = vadd.f32 %v378, %v634
    %v763 = vadd.f32 %v379, %v635
    %v764 = vadd.f32 %v380, %v636
    %v765 = vadd.f32 %v381, %v637
    %v766 = vadd.f32 %v382, %v638
    %v767 = vadd.f32 %v383, %v639
    %v768 = vadd.f32 %v384, %v640
    %v769 = vadd.f32 %v385, %v641
    %v770 = vadd.f32 %v386, %v642
    %v771 = vadd.f32 %v387, %v643
    %v772 = vadd.f32 %v388, %v644
    %v773 = vadd.f32 %v389, %v645
    %v774 = vadd.f32 %v390, %v646
    %v775 = vadd.f32 %v391, %v647
    %776 = vst [vmem:[#allocation15] sm:$0xff] %v648
    %777 = vst [vmem:[#allocation15 + $0x8] sm:$0xff] %v649
    %778 = vst [vmem:[#allocation15 + $0x10] sm:$0xff] %v650
    %779 = vst [vmem:[#allocation15 + $0x18] sm:$0xff] %v651
    %780 = vst [vmem:[#allocation15 + $0x20] sm:$0xff] %v652
    %781 = vst [vmem:[#allocation15 + $0x28] sm:$0xff] %v653
    %782 = vst [vmem:[#allocation15 + $0x30] sm:$0xff] %v654
    %783 = vst [vmem:[#allocation15 + $0x38] sm:$0xff] %v655
    %784 = vst [vmem:[#allocation15 + $0x40] sm:$0xff] %v656
    %785 = vst [vmem:[#allocation15 + $0x48] sm:$0xff] %v657
    %786 = vst [vmem:[#allocation15 + $0x50] sm:$0xff] %v658
    %787 = vst [vmem:[#allocation15 + $0x58] sm:$0xff] %v659
    %788 = vst [vmem:[#allocation15 + $0x60] sm:$0xff] %v660
    %789 = vst [vmem:[#allocation15 + $0x68] sm:$0xff] %v661
    %790 = vst [vmem:[#allocation15 + $0x70] sm:$0xff] %v662
    %791 = vst [vmem:[#allocation15 + $0x78] sm:$0xff] %v663
    %792 = vst [vmem:[#allocation15 + $0x80] sm:$0xff] %v664
    %793 = vst [vmem:[#allocation15 + $0x88] sm:$0xff] %v665
    %794 = vst [vmem:[#allocation15 + $0x90] sm:$0xff] %v666
    %795 = vst [vmem:[#allocation15 + $0x98] sm:$0xff] %v667
    %796 = vst [vmem:[#allocation15 + $0xa0] sm:$0xff] %v668
    %797 = vst [vmem:[#allocation15 + $0xa8] sm:$0xff] %v669
    %798 = vst [vmem:[#allocation15 + $0xb0] sm:$0xff] %v670
    %799 = vst [vmem:[#allocation15 + $0xb8] sm:$0xff] %v671
    %800 = vst [vmem:[#allocation15 + $0xc0] sm:$0xff] %v672
    %801 = vst [vmem:[#allocation15 + $0xc8] sm:$0xff] %v673
    %802 = vst [vmem:[#allocation15 + $0xd0] sm:$0xff] %v674
    %803 = vst [vmem:[#allocation15 + $0xd8] sm:$0xff] %v675
    %804 = vst [vmem:[#allocation15 + $0xe0] sm:$0xff] %v676
    %805 = vst [vmem:[#allocation15 + $0xe8] sm:$0xff] %v677
    %806 = vst [vmem:[#allocation15 + $0xf0] sm:$0xff] %v678
    %807 = vst [vmem:[#allocation15 + $0xf8] sm:$0xff] %v679
    %808 = vst [vmem:[#allocation15 + $0x100] sm:$0xff] %v680
    %809 = vst [vmem:[#allocation15 + $0x108] sm:$0xff] %v681
    %810 = vst [vmem:[#allocation15 + $0x110] sm:$0xff] %v682
    %811 = vst [vmem:[#allocation15 + $0x118] sm:$0xff] %v683
    %812 = vst [vmem:[#allocation15 + $0x120] sm:$0xff] %v684
    %813 = vst [vmem:[#allocation15 + $0x128] sm:$0xff] %v685
    %814 = vst [vmem:[#allocation15 + $0x130] sm:$0xff] %v686
    %815 = vst [vmem:[#allocation15 + $0x138] sm:$0xff] %v687
    %816 = vst [vmem:[#allocation15 + $0x140] sm:$0xff] %v688
    %817 = vst [vmem:[#allocation15 + $0x148] sm:$0xff] %v689
    %818 = vst [vmem:[#allocation15 + $0x150] sm:$0xff] %v690
    %819 = vst [vmem:[#allocation15 + $0x158] sm:$0xff] %v691
    %820 = vst [vmem:[#allocation15 + $0x160] sm:$0xff] %v692
    %821 = vst [vmem:[#allocation15 + $0x168] sm:$0xff] %v693
    %822 = vst [vmem:[#allocation15 + $0x170] sm:$0xff] %v694
    %823 = vst [vmem:[#allocation15 + $0x178] sm:$0xff] %v695
    %824 = vst [vmem:[#allocation15 + $0x180] sm:$0xff] %v696
    %825 = vst [vmem:[#allocation15 + $0x188] sm:$0xff] %v697
    %826 = vst [vmem:[#allocation15 + $0x190] sm:$0xff] %v698
    %827 = vst [vmem:[#allocation15 + $0x198] sm:$0xff] %v699
    %828 = vst [vmem:[#allocation15 + $0x1a0] sm:$0xff] %v700
    %829 = vst [vmem:[#allocation15 + $0x1a8] sm:$0xff] %v701
    %830 = vst [vmem:[#allocation15 + $0x1b0] sm:$0xff] %v702
    %831 = vst [vmem:[#allocation15 + $0x1b8] sm:$0xff] %v703
    %832 = vst [vmem:[#allocation15 + $0x1c0] sm:$0xff] %v704
    %833 = vst [vmem:[#allocation15 + $0x1c8] sm:$0xff] %v705
    %834 = vst [vmem:[#allocation15 + $0x1d0] sm:$0xff] %v706
    %835 = vst [vmem:[#allocation15 + $0x1d8] sm:$0xff] %v707
    %836 = vst [vmem:[#allocation15 + $0x1e0] sm:$0xff] %v708
    %837 = vst [vmem:[#allocation15 + $0x1e8] sm:$0xff] %v709
    %838 = vst [vmem:[#allocation15 + $0x1f0] sm:$0xff] %v710
    %839 = vst [vmem:[#allocation15 + $0x1f8] sm:$0xff] %v711
    %840 = vst [vmem:[#allocation15 + $0x200] sm:$0xff] %v712
    %841 = vst [vmem:[#allocation15 + $0x208] sm:$0xff] %v713
    %842 = vst [vmem:[#allocation15 + $0x210] sm:$0xff] %v714
    %843 = vst [vmem:[#allocation15 + $0x218] sm:$0xff] %v715
    %844 = vst [vmem:[#allocation15 + $0x220] sm:$0xff] %v716
    %845 = vst [vmem:[#allocation15 + $0x228] sm:$0xff] %v717
    %846 = vst [vmem:[#allocation15 + $0x230] sm:$0xff] %v718
    %847 = vst [vmem:[#allocation15 + $0x238] sm:$0xff] %v719
    %848 = vst [vmem:[#allocation15 + $0x240] sm:$0xff] %v720
    %849 = vst [vmem:[#allocation15 + $0x248] sm:$0xff] %v721
    %850 = vst [vmem:[#allocation15 + $0x250] sm:$0xff] %v722
    %851 = vst [vmem:[#allocation15 + $0x258] sm:$0xff] %v723
    %852 = vst [vmem:[#allocation15 + $0x260] sm:$0xff] %v724
    %853 = vst [vmem:[#allocation15 + $0x268] sm:$0xff] %v725
    %854 = vst [vmem:[#allocation15 + $0x270] sm:$0xff] %v726
    %855 = vst [vmem:[#allocation15 + $0x278] sm:$0xff] %v727
    %856 = vst [vmem:[#allocation15 + $0x280] sm:$0xff] %v728
    %857 = vst [vmem:[#allocation15 + $0x288] sm:$0xff] %v729
    %858 = vst [vmem:[#allocation15 + $0x290] sm:$0xff] %v730
    %859 = vst [vmem:[#allocation15 + $0x298] sm:$0xff] %v731
    %860 = vst [vmem:[#allocation15 + $0x2a0] sm:$0xff] %v732
    %861 = vst [vmem:[#allocation15 + $0x2a8] sm:$0xff] %v733
    %862 = vst [vmem:[#allocation15 + $0x2b0] sm:$0xff] %v734
    %863 = vst [vmem:[#allocation15 + $0x2b8] sm:$0xff] %v735
    %864 = vst [vmem:[#allocation15 + $0x2c0] sm:$0xff] %v736
    %865 = vst [vmem:[#allocation15 + $0x2c8] sm:$0xff] %v737
    %866 = vst [vmem:[#allocation15 + $0x2d0] sm:$0xff] %v738
    %867 = vst [vmem:[#allocation15 + $0x2d8] sm:$0xff] %v739
    %868 = vst [vmem:[#allocation15 + $0x2e0] sm:$0xff] %v740
    %869 = vst [vmem:[#allocation15 + $0x2e8] sm:$0xff] %v741
    %870 = vst [vmem:[#allocation15 + $0x2f0] sm:$0xff] %v742
    %871 = vst [vmem:[#allocation15 + $0x2f8] sm:$0xff] %v743
    %872 = vst [vmem:[#allocation15 + $0x300] sm:$0xff] %v744
    %873 = vst [vmem:[#allocation15 + $0x308] sm:$0xff] %v745
    %874 = vst [vmem:[#allocation15 + $0x310] sm:$0xff] %v746
    %875 = vst [vmem:[#allocation15 + $0x318] sm:$0xff] %v747
    %876 = vst [vmem:[#allocation15 + $0x320] sm:$0xff] %v748
    %877 = vst [vmem:[#allocation15 + $0x328] sm:$0xff] %v749
    %878 = vst [vmem:[#allocation15 + $0x330] sm:$0xff] %v750
    %879 = vst [vmem:[#allocation15 + $0x338] sm:$0xff] %v751
    %880 = vst [vmem:[#allocation15 + $0x340] sm:$0xff] %v752
    %881 = vst [vmem:[#allocation15 + $0x348] sm:$0xff] %v753
    %882 = vst [vmem:[#allocation15 + $0x350] sm:$0xff] %v754
    %883 = vst [vmem:[#allocation15 + $0x358] sm:$0xff] %v755
    %884 = vst [vmem:[#allocation15 + $0x360] sm:$0xff] %v756
    %885 = vst [vmem:[#allocation15 + $0x368] sm:$0xff] %v757
    %886 = vst [vmem:[#allocation15 + $0x370] sm:$0xff] %v758
    %887 = vst [vmem:[#allocation15 + $0x378] sm:$0xff] %v759
    %888 = vst [vmem:[#allocation15 + $0x380] sm:$0xff] %v760
    %889 = vst [vmem:[#allocation15 + $0x388] sm:$0xff] %v761
    %890 = vst [vmem:[#allocation15 + $0x390] sm:$0xff] %v762
    %891 = vst [vmem:[#allocation15 + $0x398] sm:$0xff] %v763
    %892 = vst [vmem:[#allocation15 + $0x3a0] sm:$0xff] %v764
    %893 = vst [vmem:[#allocation15 + $0x3a8] sm:$0xff] %v765
    %894 = vst [vmem:[#allocation15 + $0x3b0] sm:$0xff] %v766
    %895 = vst [vmem:[#allocation15 + $0x3b8] sm:$0xff] %v767
    %896 = vst [vmem:[#allocation15 + $0x3c0] sm:$0xff] %v768
    %897 = vst [vmem:[#allocation15 + $0x3c8] sm:$0xff] %v769
    %898 = vst [vmem:[#allocation15 + $0x3d0] sm:$0xff] %v770
    %899 = vst [vmem:[#allocation15 + $0x3d8] sm:$0xff] %v771
    %900 = vst [vmem:[#allocation15 + $0x3e0] sm:$0xff] %v772
    %901 = vst [vmem:[#allocation15 + $0x3e8] sm:$0xff] %v773
    %902 = vst [vmem:[#allocation15 + $0x3f0] sm:$0xff] %v774
    %903 = vst [vmem:[#allocation15 + $0x3f8] sm:$0xff] %v775
    %v904 = vld [vmem:[%s6] sm:$0x1]
    %v905 = vmul.f32 %v904, 0.999
    %v906 = vld [vmem:[%s5] sm:$0x1]
    %v907 = vmul.f32 %v906, 0.001
    %v908 = vadd.f32 %v905, %v907
    %909 = vst [vmem:[#allocation16] sm:$0x1] %v908
    %v910 = vld [vmem:[#allocation4] sm:$0xff]
    %v911 = vld [vmem:[#allocation4 + $0x8] sm:$0xff]
    %v912 = vld [vmem:[#allocation4 + $0x10] sm:$0xff]
    %v913 = vld [vmem:[#allocation4 + $0x18] sm:$0xff]
    %v914 = vld [vmem:[#allocation4 + $0x20] sm:$0xff]
    %v915 = vld [vmem:[#allocation4 + $0x28] sm:$0xff]
    %v916 = vld [vmem:[#allocation4 + $0x30] sm:$0xff]
    %v917 = vld [vmem:[#allocation4 + $0x38] sm:$0xff]
    %v918 = vld [vmem:[#allocation9] sm:$0xff]
    %v919 = vld [vmem:[#allocation9 + $0x8] sm:$0xff]
    %v920 = vld [vmem:[#allocation9 + $0x10] sm:$0xff]
    %v921 = vld [vmem:[#allocation9 + $0x18] sm:$0xff]
    %v922 = vld [vmem:[#allocation9 + $0x20] sm:$0xff]
    %v923 = vld [vmem:[#allocation9 + $0x28] sm:$0xff]
    %v924 = vld [vmem:[#allocation9 + $0x30] sm:$0xff]
    %v925 = vld [vmem:[#allocation9 + $0x38] sm:$0xff]
    %v926 = vld [vmem:[#allocation9 + $0x40] sm:$0xff]
    %v927 = vld [vmem:[#allocation9 + $0x48] sm:$0xff]
    %v928 = vld [vmem:[#allocation9 + $0x50] sm:$0xff]
    %v929 = vld [vmem:[#allocation9 + $0x58] sm:$0xff]
    %v930 = vld [vmem:[#allocation9 + $0x60] sm:$0xff]
    %v931 = vld [vmem:[#allocation9 + $0x68] sm:$0xff]
    %v932 = vld [vmem:[#allocation9 + $0x70] sm:$0xff]
    %v933 = vld [vmem:[#allocation9 + $0x78] sm:$0xff]
    %v934 = vld [vmem:[#allocation9 + $0x80] sm:$0xff]
    %v935 = vld [vmem:[#allocation9 + $0x88] sm:$0xff]
    %v936 = vld [vmem:[#allocation9 + $0x90] sm:$0xff]
    %v937 = vld [vmem:[#allocation9 + $0x98] sm:$0xff]
    %v938 = vld [vmem:[#allocation9 + $0xa0] sm:$0xff]
    %v939 = vld [vmem:[#allocation9 + $0xa8] sm:$0xff]
    %v940 = vld [vmem:[#allocation9 + $0xb0] sm:$0xff]
    %v941 = vld [vmem:[#allocation9 + $0xb8] sm:$0xff]
    %v942 = vld [vmem:[#allocation9 + $0xc0] sm:$0xff]
    %v943 = vld [vmem:[#allocation9 + $0xc8] sm:$0xff]
    %v944 = vld [vmem:[#allocation9 + $0xd0] sm:$0xff]
    %v945 = vld [vmem:[#allocation9 + $0xd8] sm:$0xff]
    %v946 = vld [vmem:[#allocation9 + $0xe0] sm:$0xff]
    %v947 = vld [vmem:[#allocation9 + $0xe8] sm:$0xff]
    %v948 = vld [vmem:[#allocation9 + $0xf0] sm:$0xff]
    %v949 = vld [vmem:[#allocation9 + $0xf8] sm:$0xff]
    %v950 = vld [vmem:[#allocation9 + $0x100] sm:$0xff]
    %v951 = vld [vmem:[#allocation9 + $0x108] sm:$0xff]
    %v952 = vld [vmem:[#allocation9 + $0x110] sm:$0xff]
    %v953 = vld [vmem:[#allocation9 + $0x118] sm:$0xff]
    %v954 = vld [vmem:[#allocation9 + $0x120] sm:$0xff]
    %v955 = vld [vmem:[#allocation9 + $0x128] sm:$0xff]
    %v956 = vld [vmem:[#allocation9 + $0x130] sm:$0xff]
    %v957 = vld [vmem:[#allocation9 + $0x138] sm:$0xff]
    %v958 = vld [vmem:[#allocation9 + $0x140] sm:$0xff]
    %v959 = vld [vmem:[#allocation9 + $0x148] sm:$0xff]
    %v960 = vld [vmem:[#allocation9 + $0x150] sm:$0xff]
    %v961 = vld [vmem:[#allocation9 + $0x158] sm:$0xff]
    %v962 = vld [vmem:[#allocation9 + $0x160] sm:$0xff]
    %v963 = vld [vmem:[#allocation9 + $0x168] sm:$0xff]
    %v964 = vld [vmem:[#allocation9 + $0x170] sm:$0xff]
    %v965 = vld [vmem:[#allocation9 + $0x178] sm:$0xff]
    %v966 = vld [vmem:[#allocation9 + $0x180] sm:$0xff]
    %v967 = vld [vmem:[#allocation9 + $0x188] sm:$0xff]
    %v968 = vld [vmem:[#allocation9 + $0x190] sm:$0xff]
    %v969 = vld [vmem:[#allocation9 + $0x198] sm:$0xff]
    %v970 = vld [vmem:[#allocation9 + $0x1a0] sm:$0xff]
    %v971 = vld [vmem:[#allocation9 + $0x1a8] sm:$0xff]
    %v972 = vld [vmem:[#allocation9 + $0x1b0] sm:$0xff]
    %v973 = vld [vmem:[#allocation9 + $0x1b8] sm:$0xff]
    %v974 = vld [vmem:[#allocation9 + $0x1c0] sm:$0xff]
    %v975 = vld [vmem:[#allocation9 + $0x1c8] sm:$0xff]
    %v976 = vld [vmem:[#allocation9 + $0x1d0] sm:$0xff]
    %v977 = vld [vmem:[#allocation9 + $0x1d8] sm:$0xff]
    %v978 = vld [vmem:[#allocation9 + $0x1e0] sm:$0xff]
    %v979 = vld [vmem:[#allocation9 + $0x1e8] sm:$0xff]
    %v980 = vld [vmem:[#allocation9 + $0x1f0] sm:$0xff]
    %v981 = vld [vmem:[#allocation9 + $0x1f8] sm:$0xff]
    %v982 = vld [vmem:[#allocation9 + $0x200] sm:$0xff]
    %v983 = vld [vmem:[#allocation9 + $0x208] sm:$0xff]
    %v984 = vld [vmem:[#allocation9 + $0x210] sm:$0xff]
    %v985 = vld [vmem:[#allocation9 + $0x218] sm:$0xff]
    %v986 = vld [vmem:[#allocation9 + $0x220] sm:$0xff]
    %v987 = vld [vmem:[#allocation9 + $0x228] sm:$0xff]
    %v988 = vld [vmem:[#allocation9 + $0x230] sm:$0xff]
    %v989 = vld [vmem:[#allocation9 + $0x238] sm:$0xff]
    %v990 = vld [vmem:[#allocation9 + $0x240] sm:$0xff]
    %v991 = vld [vmem:[#allocation9 + $0x248] sm:$0xff]
    %v992 = vld [vmem:[#allocation9 + $0x250] sm:$0xff]
    %v993 = vld [vmem:[#allocation9 + $0x258] sm:$0xff]
    %v994 = vld [vmem:[#allocation9 + $0x260] sm:$0xff]
    %v995 = vld [vmem:[#allocation9 + $0x268] sm:$0xff]
    %v996 = vld [vmem:[#allocation9 + $0x270] sm:$0xff]
    %v997 = vld [vmem:[#allocation9 + $0x278] sm:$0xff]
    %v998 = vld [vmem:[#allocation9 + $0x280] sm:$0xff]
    %v999 = vld [vmem:[#allocation9 + $0x288] sm:$0xff]
    %v1000 = vld [vmem:[#allocation9 + $0x290] sm:$0xff]
    %v1001 = vld [vmem:[#allocation9 + $0x298] sm:$0xff]
    %v1002 = vld [vmem:[#allocation9 + $0x2a0] sm:$0xff]
    %v1003 = vld [vmem:[#allocation9 + $0x2a8] sm:$0xff]
    %v1004 = vld [vmem:[#allocation9 + $0x2b0] sm:$0xff]
    %v1005 = vld [vmem:[#allocation9 + $0x2b8] sm:$0xff]
    %v1006 = vld [vmem:[#allocation9 + $0x2c0] sm:$0xff]
    %v1007 = vld [vmem:[#allocation9 + $0x2c8] sm:$0xff]
    %v1008 = vld [vmem:[#allocation9 + $0x2d0] sm:$0xff]
    %v1009 = vld [vmem:[#allocation9 + $0x2d8] sm:$0xff]
    %v1010 = vld [vmem:[#allocation9 + $0x2e0] sm:$0xff]
    %v1011 = vld [vmem:[#allocation9 + $0x2e8] sm:$0xff]
    %v1012 = vld [vmem:[#allocation9 + $0x2f0] sm:$0xff]
    %v1013 = vld [vmem:[#allocation9 + $0x2f8] sm:$0xff]
    %v1014 = vld [vmem:[#allocation9 + $0x300] sm:$0xff]
    %v1015 = vld [vmem:[#allocation9 + $0x308] sm:$0xff]
    %v1016 = vld [vmem:[#allocation9 + $0x310] sm:$0xff]
    %v1017 = vld [vmem:[#allocation9 + $0x318] sm:$0xff]
    %v1018 = vld [vmem:[#allocation9 + $0x320] sm:$0xff]
    %v1019 = vld [vmem:[#allocation9 + $0x328] sm:$0xff]
    %v1020 = vld [vmem:[#allocation9 + $0x330] sm:$0xff]
    %v1021 = vld [vmem:[#allocation9 + $0x338] sm:$0xff]
    %v1022 = vld [vmem:[#allocation9 + $0x340] sm:$0xff]
    %v1023 = vld [vmem:[#allocation9 + $0x348] sm:$0xff]
    %v1024 = vld [vmem:[#allocation9 + $0x350] sm:$0xff]
    %v1025 = vld [vmem:[#allocation9 + $0x358] sm:$0xff]
    %v1026 = vld [vmem:[#allocation9 + $0x360] sm:$0xff]
    %v1027 = vld [vmem:[#allocation9 + $0x368] sm:$0xff]
    %v1028 = vld [vmem:[#allocation9 + $0x370] sm:$0xff]
    %v1029 = vld [vmem:[#allocation9 + $0x378] sm:$0xff]
    %v1030 = vld [vmem:[#allocation9 + $0x380] sm:$0xff]
    %v1031 = vld [vmem:[#allocation9 + $0x388] sm:$0xff]
    %v1032 = vld [vmem:[#allocation9 + $0x390] sm:$0xff]
    %v1033 = vld [vmem:[#allocation9 + $0x398] sm:$0xff]
    %v1034 = vld [vmem:[#allocation9 + $0x3a0] sm:$0xff]
    %v1035 = vld [vmem:[#allocation9 + $0x3a8] sm:$0xff]
    %v1036 = vld [vmem:[#allocation9 + $0x3b0] sm:$0xff]
    %v1037 = vld [vmem:[#allocation9 + $0x3b8] sm:$0xff]
    %v1038 = vld [vmem:[#allocation9 + $0x3c0] sm:$0xff]
    %v1039 = vld [vmem:[#allocation9 + $0x3c8] sm:$0xff]
    %v1040 = vld [vmem:[#allocation9 + $0x3d0] sm:$0xff]
    %v1041 = vld [vmem:[#allocation9 + $0x3d8] sm:$0xff]
    %v1042 = vld [vmem:[#allocation9 + $0x3e0] sm:$0xff]
    %v1043 = vld [vmem:[#allocation9 + $0x3e8] sm:$0xff]
    %v1044 = vld [vmem:[#allocation9 + $0x3f0] sm:$0xff]
    %v1045 = vld [vmem:[#allocation9 + $0x3f8] sm:$0xff]
    %v1046 = vld [vmem:[%s5] sm:$0x1]
    %v1048 = vperm.slane %v1046, 0
    %1050 = vmatpush.msra.mxu0 %v933
    %1051 = vmatpush.msra.mxu0 %v932
    %1052 = vmatpush.msra.mxu0 %v931
    %1053 = vmatpush.msra.mxu0 %v930
    %1054 = vmatpush.msra.mxu0 %v929
    %1055 = vmatpush.msra.mxu0 %v928
    %1056 = vmatpush.msra.mxu0 %v927
    %1057 = vmatpush.msra.mxu0 %v926
    %1058 = vmatpush.msra.mxu0 %v925
    %1059 = vmatpush.msra.mxu0 %v924
    %1060 = vmatpush.msra.mxu0 %v923
    %1061 = vmatpush.msra.mxu0 %v922
    %1062 = vmatpush.msra.mxu0 %v921
    %1063 = vmatpush.msra.mxu0 %v920
    %1064 = vmatpush.msra.mxu0 %v919
    %1065 = vmatpush.msra.mxu0 %v918
    %1066 = vmatmul.f32.gmra.mxu0 %v910
    %v1067 = vpop.f32.mrf.mxu0
    %v1068 = vadd.f32 %v1048, %v1067
    %1069 = vdwg.mxu0
    %1070 = vmatpush.msra.mxu0 %v949
    %1071 = vmatpush.msra.mxu0 %v948
    %1072 = vmatpush.msra.mxu0 %v947
    %1073 = vmatpush.msra.mxu0 %v946
    %1074 = vmatpush.msra.mxu0 %v945
    %1075 = vmatpush.msra.mxu0 %v944
    %1076 = vmatpush.msra.mxu0 %v943
    %1077 = vmatpush.msra.mxu0 %v942
    %1078 = vmatpush.msra.mxu0 %v941
    %1079 = vmatpush.msra.mxu0 %v940
    %1080 = vmatpush.msra.mxu0 %v939
    %1081 = vmatpush.msra.mxu0 %v938
    %1082 = vmatpush.msra.mxu0 %v937
    %1083 = vmatpush.msra.mxu0 %v936
    %1084 = vmatpush.msra.mxu0 %v935
    %1085 = vmatpush.msra.mxu0 %v934
    %1086 = vmatmul.f32.gmra.mxu0 %v911
    %v1087 = vpop.f32.mrf.mxu0
    %v1088 = vadd.f32 %v1068, %v1087
    %1089 = vdwg.mxu0
    %1090 = vmatpush.msra.mxu0 %v965
    %1091 = vmatpush.msra.mxu0 %v964
    %1092 = vmatpush.msra.mxu0 %v963
    %1093 = vmatpush.msra.mxu0 %v962
    %1094 = vmatpush.msra.mxu0 %v961
    %1095 = vmatpush.msra.mxu0 %v960
    %1096 = vmatpush.msra.mxu0 %v959
    %1097 = vmatpush.msra.mxu0 %v958
    %1098 = vmatpush.msra.mxu0 %v957
    %1099 = vmatpush.msra.mxu0 %v956
    %1100 = vmatpush.msra.mxu0 %v955
    %1101 = vmatpush.msra.mxu0 %v954
    %1102 = vmatpush.msra.mxu0 %v953
    %1103 = vmatpush.msra.mxu0 %v952
    %1104 = vmatpush.msra.mxu0 %v951
    %1105 = vmatpush.msra.mxu0 %v950
    %1106 = vmatmul.f32.gmra.mxu0 %v912
    %v1107 = vpop.f32.mrf.mxu0
    %v1108 = vadd.f32 %v1088, %v1107
    %1109 = vdwg.mxu0
    %1110 = vmatpush.msra.mxu0 %v981
    %1111 = vmatpush.msra.mxu0 %v980
    %1112 = vmatpush.msra.mxu0 %v979
    %1113 = vmatpush.msra.mxu0 %v978
    %1114 = vmatpush.msra.mxu0 %v977
    %1115 = vmatpush.msra.mxu0 %v976
    %1116 = vmatpush.msra.mxu0 %v975
    %1117 = vmatpush.msra.mxu0 %v974
    %1118 = vmatpush.msra.mxu0 %v973
    %1119 = vmatpush.msra.mxu0 %v972
    %1120 = vmatpush.msra.mxu0 %v971
    %1121 = vmatpush.msra.mxu0 %v970
    %1122 = vmatpush.msra.mxu0 %v969
    %1123 = vmatpush.msra.mxu0 %v968
    %1124 = vmatpush.msra.mxu0 %v967
    %1125 = vmatpush.msra.mxu0 %v966
    %1126 = vmatmul.f32.gmra.mxu0 %v913
    %v1127 = vpop.f32.mrf.mxu0
    %v1128 = vadd.f32 %v1108, %v1127
    %1129 = vdwg.mxu0
    %1130 = vmatpush.msra.mxu0 %v997
    %1131 = vmatpush.msra.mxu0 %v996
    %1132 = vmatpush.msra.mxu0 %v995
    %1133 = vmatpush.msra.mxu0 %v994
    %1134 = vmatpush.msra.mxu0 %v993
    %1135 = vmatpush.msra.mxu0 %v992
    %1136 = vmatpush.msra.mxu0 %v991
    %1137 = vmatpush.msra.mxu0 %v990
    %1138 = vmatpush.msra.mxu0 %v989
    %1139 = vmatpush.msra.mxu0 %v988
    %1140 = vmatpush.msra.mxu0 %v987
    %1141 = vmatpush.msra.mxu0 %v986
    %1142 = vmatpush.msra.mxu0 %v985
    %1143 = vmatpush.msra.mxu0 %v984
    %1144 = vmatpush.msra.mxu0 %v983
    %1145 = vmatpush.msra.mxu0 %v982
    %1146 = vmatmul.f32.gmra.mxu0 %v914
    %v1147 = vpop.f32.mrf.mxu0
    %v1148 = vadd.f32 %v1128, %v1147
    %1149 = vdwg.mxu0
    %1150 = vmatpush.msra.mxu0 %v1013
    %1151 = vmatpush.msra.mxu0 %v1012
    %1152 = vmatpush.msra.mxu0 %v1011
    %1153 = vmatpush.msra.mxu0 %v1010
    %1154 = vmatpush.msra.mxu0 %v1009
    %1155 = vmatpush.msra.mxu0 %v1008
    %1156 = vmatpush.msra.mxu0 %v1007
    %1157 = vmatpush.msra.mxu0 %v1006
    %1158 = vmatpush.msra.mxu0 %v1005
    %1159 = vmatpush.msra.mxu0 %v1004
    %1160 = vmatpush.msra.mxu0 %v1003
    %1161 = vmatpush.msra.mxu0 %v1002
    %1162 = vmatpush.msra.mxu0 %v1001
    %1163 = vmatpush.msra.mxu0 %v1000
    %1164 = vmatpush.msra.mxu0 %v999
    %1165 = vmatpush.msra.mxu0 %v998
    %1166 = vmatmul.f32.gmra.mxu0 %v915
    %v1167 = vpop.f32.mrf.mxu0
    %v1168 = vadd.f32 %v1148, %v1167
    %1169 = vdwg.mxu0
    %1170 = vmatpush.msra.mxu0 %v1029
    %1171 = vmatpush.msra.mxu0 %v1028
    %1172 = vmatpush.msra.mxu0 %v1027
    %1173 = vmatpush.msra.mxu0 %v1026
    %1174 = vmatpush.msra.mxu0 %v1025
    %1175 = vmatpush.msra.mxu0 %v1024
    %1176 = vmatpush.msra.mxu0 %v1023
    %1177 = vmatpush.msra.mxu0 %v1022
    %1178 = vmatpush.msra.mxu0 %v1021
    %1179 = vmatpush.msra.mxu0 %v1020
    %1180 = vmatpush.msra.mxu0 %v1019
    %1181 = vmatpush.msra.mxu0 %v1018
    %1182 = vmatpush.msra.mxu0 %v1017
    %1183 = vmatpush.msra.mxu0 %v1016
    %1184 = vmatpush.msra.mxu0 %v1015
    %1185 = vmatpush.msra.mxu0 %v1014
    %1186 = vmatmul.f32.gmra.mxu0 %v916
    %v1187 = vpop.f32.mrf.mxu0
    %v1188 = vadd.f32 %v1168, %v1187
    %1189 = vdwg.mxu0
    %1190 = vmatpush.msra.mxu0 %v1045
    %1191 = vmatpush.msra.mxu0 %v1044
    %1192 = vmatpush.msra.mxu0 %v1043
    %1193 = vmatpush.msra.mxu0 %v1042
    %1194 = vmatpush.msra.mxu0 %v1041
    %1195 = vmatpush.msra.mxu0 %v1040
    %1196 = vmatpush.msra.mxu0 %v1039
    %1197 = vmatpush.msra.mxu0 %v1038
    %1198 = vmatpush.msra.mxu0 %v1037
    %1199 = vmatpush.msra.mxu0 %v1036
    %1200 = vmatpush.msra.mxu0 %v1035
    %1201 = vmatpush.msra.mxu0 %v1034
    %1202 = vmatpush.msra.mxu0 %v1033
    %1203 = vmatpush.msra.mxu0 %v1032
    %1204 = vmatpush.msra.mxu0 %v1031
    %1205 = vmatpush.msra.mxu0 %v1030
    %1206 = vmatmul.f32.gmra.mxu0 %v917
    %v1207 = vpop.f32.mrf.mxu0
    %v1208 = vadd.f32 %v1188, %v1207
    %1209 = vdwg.mxu0
    %v1210 = vmul.f32 %v1208, %v1208
    %1211 = vadd.xlane.f32.xlu0 %v1210
    %v1212 = vpop.xlane.xlu0 %1211
    %v1213 = vmax.f32 %v1212, 1e-24
    %v1214 = vrsqrt.pop %v1213
    %v1215 = vmul.f32 %v1214, %v1213
    %v1216 = vmul.f32 %v1215, %v1214
    %v1217 = vmul.f32 0.5, %v1216
    %v1218 = vsub.f32 1.5, %v1217
    %v1219 = vmul.f32 %v1214, %v1218
    %vm1220 = vweird.f32 %v1213
    %vm1221 = vweird.f32 %v1214
    %vm1222 = vmor %vm1220, %vm1221
    %v1223 = vsel %vm1222, %v1214, %v1219
    %v1224 = vmul.f32 %v1208, %v1223
    %v1225 = vld [vmem:[#allocation7] sm:$0xff]
    %v1226 = vld [vmem:[#allocation7 + $0x8] sm:$0xff]
    %v1227 = vld [vmem:[#allocation7 + $0x10] sm:$0xff]
    %v1228 = vld [vmem:[#allocation7 + $0x18] sm:$0xff]
    %v1229 = vld [vmem:[#allocation7 + $0x20] sm:$0xff]
    %v1230 = vld [vmem:[#allocation7 + $0x28] sm:$0xff]
    %v1231 = vld [vmem:[#allocation7 + $0x30] sm:$0xff]
    %v1232 = vld [vmem:[#allocation7 + $0x38] sm:$0xff]
    %v1233 = vld [vmem:[#allocation15] sm:$0xff]
    %v1234 = vld [vmem:[#allocation15 + $0x8] sm:$0xff]
    %v1235 = vld [vmem:[#allocation15 + $0x10] sm:$0xff]
    %v1236 = vld [vmem:[#allocation15 + $0x18] sm:$0xff]
    %v1237 = vld [vmem:[#allocation15 + $0x20] sm:$0xff]
    %v1238 = vld [vmem:[#allocation15 + $0x28] sm:$0xff]
    %v1239 = vld [vmem:[#allocation15 + $0x30] sm:$0xff]
    %v1240 = vld [vmem:[#allocation15 + $0x38] sm:$0xff]
    %v1241 = vld [vmem:[#allocation15 + $0x40] sm:$0xff]
    %v1242 = vld [vmem:[#allocation15 + $0x48] sm:$0xff]
    %v1243 = vld [vmem:[#allocation15 + $0x50] sm:$0xff]
    %v1244 = vld [vmem:[#allocation15 + $0x58] sm:$0xff]
    %v1245 = vld [vmem:[#allocation15 + $0x60] sm:$0xff]
    %v1246 = vld [vmem:[#allocation15 + $0x68] sm:$0xff]
    %v1247 = vld [vmem:[#allocation15 + $0x70] sm:$0xff]
    %v1248 = vld [vmem:[#allocation15 + $0x78] sm:$0xff]
    %v1249 = vld [vmem:[#allocation15 + $0x80] sm:$0xff]
    %v1250 = vld [vmem:[#allocation15 + $0x88] sm:$0xff]
    %v1251 = vld [vmem:[#allocation15 + $0x90] sm:$0xff]
    %v1252 = vld [vmem:[#allocation15 + $0x98] sm:$0xff]
    %v1253 = vld [vmem:[#allocation15 + $0xa0] sm:$0xff]
    %v1254 = vld [vmem:[#allocation15 + $0xa8] sm:$0xff]
    %v1255 = vld [vmem:[#allocation15 + $0xb0] sm:$0xff]
    %v1256 = vld [vmem:[#allocation15 + $0xb8] sm:$0xff]
    %v1257 = vld [vmem:[#allocation15 + $0xc0] sm:$0xff]
    %v1258 = vld [vmem:[#allocation15 + $0xc8] sm:$0xff]
    %v1259 = vld [vmem:[#allocation15 + $0xd0] sm:$0xff]
    %v1260 = vld [vmem:[#allocation15 + $0xd8] sm:$0xff]
    %v1261 = vld [vmem:[#allocation15 + $0xe0] sm:$0xff]
    %v1262 = vld [vmem:[#allocation15 + $0xe8] sm:$0xff]
    %v1263 = vld [vmem:[#allocation15 + $0xf0] sm:$0xff]
    %v1264 = vld [vmem:[#allocation15 + $0xf8] sm:$0xff]
    %v1265 = vld [vmem:[#allocation15 + $0x100] sm:$0xff]
    %v1266 = vld [vmem:[#allocation15 + $0x108] sm:$0xff]
    %v1267 = vld [vmem:[#allocation15 + $0x110] sm:$0xff]
    %v1268 = vld [vmem:[#allocation15 + $0x118] sm:$0xff]
    %v1269 = vld [vmem:[#allocation15 + $0x120] sm:$0xff]
    %v1270 = vld [vmem:[#allocation15 + $0x128] sm:$0xff]
    %v1271 = vld [vmem:[#allocation15 + $0x130] sm:$0xff]
    %v1272 = vld [vmem:[#allocation15 + $0x138] sm:$0xff]
    %v1273 = vld [vmem:[#allocation15 + $0x140] sm:$0xff]
    %v1274 = vld [vmem:[#allocation15 + $0x148] sm:$0xff]
    %v1275 = vld [vmem:[#allocation15 + $0x150] sm:$0xff]
    %v1276 = vld [vmem:[#allocation15 + $0x158] sm:$0xff]
    %v1277 = vld [vmem:[#allocation15 + $0x160] sm:$0xff]
    %v1278 = vld [vmem:[#allocation15 + $0x168] sm:$0xff]
    %v1279 = vld [vmem:[#allocation15 + $0x170] sm:$0xff]
    %v1280 = vld [vmem:[#allocation15 + $0x178] sm:$0xff]
    %v1281 = vld [vmem:[#allocation15 + $0x180] sm:$0xff]
    %v1282 = vld [vmem:[#allocation15 + $0x188] sm:$0xff]
    %v1283 = vld [vmem:[#allocation15 + $0x190] sm:$0xff]
    %v1284 = vld [vmem:[#allocation15 + $0x198] sm:$0xff]
    %v1285 = vld [vmem:[#allocation15 + $0x1a0] sm:$0xff]
    %v1286 = vld [vmem:[#allocation15 + $0x1a8] sm:$0xff]
    %v1287 = vld [vmem:[#allocation15 + $0x1b0] sm:$0xff]
    %v1288 = vld [vmem:[#allocation15 + $0x1b8] sm:$0xff]
    %v1289 = vld [vmem:[#allocation15 + $0x1c0] sm:$0xff]
    %v1290 = vld [vmem:[#allocation15 + $0x1c8] sm:$0xff]
    %v1291 = vld [vmem:[#allocation15 + $0x1d0] sm:$0xff]
    %v1292 = vld [vmem:[#allocation15 + $0x1d8] sm:$0xff]
    %v1293 = vld [vmem:[#allocation15 + $0x1e0] sm:$0xff]
    %v1294 = vld [vmem:[#allocation15 + $0x1e8] sm:$0xff]
    %v1295 = vld [vmem:[#allocation15 + $0x1f0] sm:$0xff]
    %v1296 = vld [vmem:[#allocation15 + $0x1f8] sm:$0xff]
    %v1297 = vld [vmem:[#allocation15 + $0x200] sm:$0xff]
    %v1298 = vld [vmem:[#allocation15 + $0x208] sm:$0xff]
    %v1299 = vld [vmem:[#allocation15 + $0x210] sm:$0xff]
    %v1300 = vld [vmem:[#allocation15 + $0x218] sm:$0xff]
    %v1301 = vld [vmem:[#allocation15 + $0x220] sm:$0xff]
    %v1302 = vld [vmem:[#allocation15 + $0x228] sm:$0xff]
    %v1303 = vld [vmem:[#allocation15 + $0x230] sm:$0xff]
    %v1304 = vld [vmem:[#allocation15 + $0x238] sm:$0xff]
    %v1305 = vld [vmem:[#allocation15 + $0x240] sm:$0xff]
    %v1306 = vld [vmem:[#allocation15 + $0x248] sm:$0xff]
    %v1307 = vld [vmem:[#allocation15 + $0x250] sm:$0xff]
    %v1308 = vld [vmem:[#allocation15 + $0x258] sm:$0xff]
    %v1309 = vld [vmem:[#allocation15 + $0x260] sm:$0xff]
    %v1310 = vld [vmem:[#allocation15 + $0x268] sm:$0xff]
    %v1311 = vld [vmem:[#allocation15 + $0x270] sm:$0xff]
    %v1312 = vld [vmem:[#allocation15 + $0x278] sm:$0xff]
    %v1313 = vld [vmem:[#allocation15 + $0x280] sm:$0xff]
    %v1314 = vld [vmem:[#allocation15 + $0x288] sm:$0xff]
    %v1315 = vld [vmem:[#allocation15 + $0x290] sm:$0xff]
    %v1316 = vld [vmem:[#allocation15 + $0x298] sm:$0xff]
    %v1317 = vld [vmem:[#allocation15 + $0x2a0] sm:$0xff]
    %v1318 = vld [vmem:[#allocation15 + $0x2a8] sm:$0xff]
    %v1319 = vld [vmem:[#allocation15 + $0x2b0] sm:$0xff]
    %v1320 = vld [vmem:[#allocation15 + $0x2b8] sm:$0xff]
    %v1321 = vld [vmem:[#allocation15 + $0x2c0] sm:$0xff]
    %v1322 = vld [vmem:[#allocation15 + $0x2c8] sm:$0xff]
    %v1323 = vld [vmem:[#allocation15 + $0x2d0] sm:$0xff]
    %v1324 = vld [vmem:[#allocation15 + $0x2d8] sm:$0xff]
    %v1325 = vld [vmem:[#allocation15 + $0x2e0] sm:$0xff]
    %v1326 = vld [vmem:[#allocation15 + $0x2e8] sm:$0xff]
    %v1327 = vld [vmem:[#allocation15 + $0x2f0] sm:$0xff]
    %v1328 = vld [vmem:[#allocation15 + $0x2f8] sm:$0xff]
    %v1329 = vld [vmem:[#allocation15 + $0x300] sm:$0xff]
    %v1330 = vld [vmem:[#allocation15 + $0x308] sm:$0xff]
    %v1331 = vld [vmem:[#allocation15 + $0x310] sm:$0xff]
    %v1332 = vld [vmem:[#allocation15 + $0x318] sm:$0xff]
    %v1333 = vld [vmem:[#allocation15 + $0x320] sm:$0xff]
    %v1334 = vld [vmem:[#allocation15 + $0x328] sm:$0xff]
    %v1335 = vld [vmem:[#allocation15 + $0x330] sm:$0xff]
    %v1336 = vld [vmem:[#allocation15 + $0x338] sm:$0xff]
    %v1337 = vld [vmem:[#allocation15 + $0x340] sm:$0xff]
    %v1338 = vld [vmem:[#allocation15 + $0x348] sm:$0xff]
    %v1339 = vld [vmem:[#allocation15 + $0x350] sm:$0xff]
    %v1340 = vld [vmem:[#allocation15 + $0x358] sm:$0xff]
    %v1341 = vld [vmem:[#allocation15 + $0x360] sm:$0xff]
    %v1342 = vld [vmem:[#allocation15 + $0x368] sm:$0xff]
    %v1343 = vld [vmem:[#allocation15 + $0x370] sm:$0xff]
    %v1344 = vld [vmem:[#allocation15 + $0x378] sm:$0xff]
    %v1345 = vld [vmem:[#allocation15 + $0x380] sm:$0xff]
    %v1346 = vld [vmem:[#allocation15 + $0x388] sm:$0xff]
    %v1347 = vld [vmem:[#allocation15 + $0x390] sm:$0xff]
    %v1348 = vld [vmem:[#allocation15 + $0x398] sm:$0xff]
    %v1349 = vld [vmem:[#allocation15 + $0x3a0] sm:$0xff]
    %v1350 = vld [vmem:[#allocation15 + $0x3a8] sm:$0xff]
    %v1351 = vld [vmem:[#allocation15 + $0x3b0] sm:$0xff]
    %v1352 = vld [vmem:[#allocation15 + $0x3b8] sm:$0xff]
    %v1353 = vld [vmem:[#allocation15 + $0x3c0] sm:$0xff]
    %v1354 = vld [vmem:[#allocation15 + $0x3c8] sm:$0xff]
    %v1355 = vld [vmem:[#allocation15 + $0x3d0] sm:$0xff]
    %v1356 = vld [vmem:[#allocation15 + $0x3d8] sm:$0xff]
    %v1357 = vld [vmem:[#allocation15 + $0x3e0] sm:$0xff]
    %v1358 = vld [vmem:[#allocation15 + $0x3e8] sm:$0xff]
    %v1359 = vld [vmem:[#allocation15 + $0x3f0] sm:$0xff]
    %v1360 = vld [vmem:[#allocation15 + $0x3f8] sm:$0xff]
    %v1361 = vld [vmem:[#allocation16] sm:$0x1]
    %v1363 = vperm.slane %v1361, 0
    %1365 = vmatpush.msra.mxu0 %v1248
    %1366 = vmatpush.msra.mxu0 %v1247
    %1367 = vmatpush.msra.mxu0 %v1246
    %1368 = vmatpush.msra.mxu0 %v1245
    %1369 = vmatpush.msra.mxu0 %v1244
    %1370 = vmatpush.msra.mxu0 %v1243
    %1371 = vmatpush.msra.mxu0 %v1242
    %1372 = vmatpush.msra.mxu0 %v1241
    %1373 = vmatpush.msra.mxu0 %v1240
    %1374 = vmatpush.msra.mxu0 %v1239
    %1375 = vmatpush.msra.mxu0 %v1238
    %1376 = vmatpush.msra.mxu0 %v1237
    %1377 = vmatpush.msra.mxu0 %v1236
    %1378 = vmatpush.msra.mxu0 %v1235
    %1379 = vmatpush.msra.mxu0 %v1234
    %1380 = vmatpush.msra.mxu0 %v1233
    %1381 = vmatmul.f32.gmra.mxu0 %v1225
    %v1382 = vpop.f32.mrf.mxu0
    %v1383 = vadd.f32 %v1363, %v1382
    %1384 = vdwg.mxu0
    %1385 = vmatpush.msra.mxu0 %v1264
    %1386 = vmatpush.msra.mxu0 %v1263
    %1387 = vmatpush.msra.mxu0 %v1262
    %1388 = vmatpush.msra.mxu0 %v1261
    %1389 = vmatpush.msra.mxu0 %v1260
    %1390 = vmatpush.msra.mxu0 %v1259
    %1391 = vmatpush.msra.mxu0 %v1258
    %1392 = vmatpush.msra.mxu0 %v1257
    %1393 = vmatpush.msra.mxu0 %v1256
    %1394 = vmatpush.msra.mxu0 %v1255
    %1395 = vmatpush.msra.mxu0 %v1254
    %1396 = vmatpush.msra.mxu0 %v1253
    %1397 = vmatpush.msra.mxu0 %v1252
    %1398 = vmatpush.msra.mxu0 %v1251
    %1399 = vmatpush.msra.mxu0 %v1250
    %1400 = vmatpush.msra.mxu0 %v1249
    %1401 = vmatmul.f32.gmra.mxu0 %v1226
    %v1402 = vpop.f32.mrf.mxu0
    %v1403 = vadd.f32 %v1383, %v1402
    %1404 = vdwg.mxu0
    %1405 = vmatpush.msra.mxu0 %v1280
    %1406 = vmatpush.msra.mxu0 %v1279
    %1407 = vmatpush.msra.mxu0 %v1278
    %1408 = vmatpush.msra.mxu0 %v1277
    %1409 = vmatpush.msra.mxu0 %v1276
    %1410 = vmatpush.msra.mxu0 %v1275
    %1411 = vmatpush.msra.mxu0 %v1274
    %1412 = vmatpush.msra.mxu0 %v1273
    %1413 = vmatpush.msra.mxu0 %v1272
    %1414 = vmatpush.msra.mxu0 %v1271
    %1415 = vmatpush.msra.mxu0 %v1270
    %1416 = vmatpush.msra.mxu0 %v1269
    %1417 = vmatpush.msra.mxu0 %v1268
    %1418 = vmatpush.msra.mxu0 %v1267
    %1419 = vmatpush.msra.mxu0 %v1266
    %1420 = vmatpush.msra.mxu0 %v1265
    %1421 = vmatmul.f32.gmra.mxu0 %v1227
    %v1422 = vpop.f32.mrf.mxu0
    %v1423 = vadd.f32 %v1403, %v1422
    %1424 = vdwg.mxu0
    %1425 = vmatpush.msra.mxu0 %v1296
    %1426 = vmatpush.msra.mxu0 %v1295
    %1427 = vmatpush.msra.mxu0 %v1294
    %1428 = vmatpush.msra.mxu0 %v1293
    %1429 = vmatpush.msra.mxu0 %v1292
    %1430 = vmatpush.msra.mxu0 %v1291
    %1431 = vmatpush.msra.mxu0 %v1290
    %1432 = vmatpush.msra.mxu0 %v1289
    %1433 = vmatpush.msra.mxu0 %v1288
    %1434 = vmatpush.msra.mxu0 %v1287
    %1435 = vmatpush.msra.mxu0 %v1286
    %1436 = vmatpush.msra.mxu0 %v1285
    %1437 = vmatpush.msra.mxu0 %v1284
    %1438 = vmatpush.msra.mxu0 %v1283
    %1439 = vmatpush.msra.mxu0 %v1282
    %1440 = vmatpush.msra.mxu0 %v1281
    %1441 = vmatmul.f32.gmra.mxu0 %v1228
    %v1442 = vpop.f32.mrf.mxu0
    %v1443 = vadd.f32 %v1423, %v1442
    %1444 = vdwg.mxu0
    %1445 = vmatpush.msra.mxu0 %v1312
    %1446 = vmatpush.msra.mxu0 %v1311
    %1447 = vmatpush.msra.mxu0 %v1310
    %1448 = vmatpush.msra.mxu0 %v1309
    %1449 = vmatpush.msra.mxu0 %v1308
    %1450 = vmatpush.msra.mxu0 %v1307
    %1451 = vmatpush.msra.mxu0 %v1306
    %1452 = vmatpush.msra.mxu0 %v1305
    %1453 = vmatpush.msra.mxu0 %v1304
    %1454 = vmatpush.msra.mxu0 %v1303
    %1455 = vmatpush.msra.mxu0 %v1302
    %1456 = vmatpush.msra.mxu0 %v1301
    %1457 = vmatpush.msra.mxu0 %v1300
    %1458 = vmatpush.msra.mxu0 %v1299
    %1459 = vmatpush.msra.mxu0 %v1298
    %1460 = vmatpush.msra.mxu0 %v1297
    %1461 = vmatmul.f32.gmra.mxu0 %v1229
    %v1462 = vpop.f32.mrf.mxu0
    %v1463 = vadd.f32 %v1443, %v1462
    %1464 = vdwg.mxu0
    %1465 = vmatpush.msra.mxu0 %v1328
    %1466 = vmatpush.msra.mxu0 %v1327
    %1467 = vmatpush.msra.mxu0 %v1326
    %1468 = vmatpush.msra.mxu0 %v1325
    %1469 = vmatpush.msra.mxu0 %v1324
    %1470 = vmatpush.msra.mxu0 %v1323
    %1471 = vmatpush.msra.mxu0 %v1322
    %1472 = vmatpush.msra.mxu0 %v1321
    %1473 = vmatpush.msra.mxu0 %v1320
    %1474 = vmatpush.msra.mxu0 %v1319
    %1475 = vmatpush.msra.mxu0 %v1318
    %1476 = vmatpush.msra.mxu0 %v1317
    %1477 = vmatpush.msra.mxu0 %v1316
    %1478 = vmatpush.msra.mxu0 %v1315
    %1479 = vmatpush.msra.mxu0 %v1314
    %1480 = vmatpush.msra.mxu0 %v1313
    %1481 = vmatmul.f32.gmra.mxu0 %v1230
    %v1482 = vpop.f32.mrf.mxu0
    %v1483 = vadd.f32 %v1463, %v1482
    %1484 = vdwg.mxu0
    %1485 = vmatpush.msra.mxu0 %v1344
    %1486 = vmatpush.msra.mxu0 %v1343
    %1487 = vmatpush.msra.mxu0 %v1342
    %1488 = vmatpush.msra.mxu0 %v1341
    %1489 = vmatpush.msra.mxu0 %v1340
    %1490 = vmatpush.msra.mxu0 %v1339
    %1491 = vmatpush.msra.mxu0 %v1338
    %1492 = vmatpush.msra.mxu0 %v1337
    %1493 = vmatpush.msra.mxu0 %v1336
    %1494 = vmatpush.msra.mxu0 %v1335
    %1495 = vmatpush.msra.mxu0 %v1334
    %1496 = vmatpush.msra.mxu0 %v1333
    %1497 = vmatpush.msra.mxu0 %v1332
    %1498 = vmatpush.msra.mxu0 %v1331
    %1499 = vmatpush.msra.mxu0 %v1330
    %1500 = vmatpush.msra.mxu0 %v1329
    %1501 = vmatmul.f32.gmra.mxu0 %v1231
    %v1502 = vpop.f32.mrf.mxu0
    %v1503 = vadd.f32 %v1483, %v1502
    %1504 = vdwg.mxu0
    %1505 = vmatpush.msra.mxu0 %v1360
    %1506 = vmatpush.msra.mxu0 %v1359
    %1507 = vmatpush.msra.mxu0 %v1358
    %1508 = vmatpush.msra.mxu0 %v1357
    %1509 = vmatpush.msra.mxu0 %v1356
    %1510 = vmatpush.msra.mxu0 %v1355
    %1511 = vmatpush.msra.mxu0 %v1354
    %1512 = vmatpush.msra.mxu0 %v1353
    %1513 = vmatpush.msra.mxu0 %v1352
    %1514 = vmatpush.msra.mxu0 %v1351
    %1515 = vmatpush.msra.mxu0 %v1350
    %1516 = vmatpush.msra.mxu0 %v1349
    %1517 = vmatpush.msra.mxu0 %v1348
    %1518 = vmatpush.msra.mxu0 %v1347
    %1519 = vmatpush.msra.mxu0 %v1346
    %1520 = vmatpush.msra.mxu0 %v1345
    %1521 = vmatmul.f32.gmra.mxu0 %v1232
    %v1522 = vpop.f32.mrf.mxu0
    %v1523 = vadd.f32 %v1503, %v1522
    %1524 = vdwg.mxu0
    %v1525 = vmul.f32 %v1523, %v1523
    %1526 = vadd.xlane.f32.xlu0 %v1525
    %v1527 = vpop.xlane.xlu0 %1526
    %v1528 = vmax.f32 %v1527, 1e-24
    %v1529 = vrsqrt.pop %v1528
    %v1530 = vmul.f32 %v1529, %v1528
    %v1531 = vmul.f32 %v1530, %v1529
    %v1532 = vmul.f32 0.5, %v1531
    %v1533 = vsub.f32 1.5, %v1532
    %v1534 = vmul.f32 %v1529, %v1533
    %vm1535 = vweird.f32 %v1528
    %vm1536 = vweird.f32 %v1529
    %vm1537 = vmor %vm1535, %vm1536
    %v1538 = vsel %vm1537, %v1529, %v1534
    %v1539 = vmul.f32 %v1523, %v1538
    %v1540 = vld [vmem:[#allocation12] sm:$0xff]
    %v1541 = vld [vmem:[#allocation12 + $0x8] sm:$0xff]
    %v1542 = vld [vmem:[#allocation12 + $0x10] sm:$0xff]
    %v1543 = vld [vmem:[#allocation12 + $0x18] sm:$0xff]
    %v1544 = vld [vmem:[#allocation12 + $0x20] sm:$0xff]
    %v1545 = vld [vmem:[#allocation12 + $0x28] sm:$0xff]
    %v1546 = vld [vmem:[#allocation12 + $0x30] sm:$0xff]
    %v1547 = vld [vmem:[#allocation12 + $0x38] sm:$0xff]
    %v1548 = vld [vmem:[#allocation12 + $0x40] sm:$0xff]
    %v1549 = vld [vmem:[#allocation12 + $0x48] sm:$0xff]
    %v1550 = vld [vmem:[#allocation12 + $0x50] sm:$0xff]
    %v1551 = vld [vmem:[#allocation12 + $0x58] sm:$0xff]
    %v1552 = vld [vmem:[#allocation12 + $0x60] sm:$0xff]
    %v1553 = vld [vmem:[#allocation12 + $0x68] sm:$0xff]
    %v1554 = vld [vmem:[#allocation12 + $0x70] sm:$0xff]
    %v1555 = vld [vmem:[#allocation12 + $0x78] sm:$0xf]
    %1556 = vst [vmem:[#allocation18] sm:$0xff] %v1540
    %1557 = vst [vmem:[#allocation18 + $0x8] sm:$0xff] %v1541
    %1558 = vst [vmem:[#allocation18 + $0x10] sm:$0xff] %v1542
    %1559 = vst [vmem:[#allocation18 + $0x18] sm:$0xff] %v1543
    %1560 = vst [vmem:[#allocation18 + $0x20] sm:$0xff] %v1544
    %1561 = vst [vmem:[#allocation18 + $0x28] sm:$0xff] %v1545
    %1562 = vst [vmem:[#allocation18 + $0x30] sm:$0xff] %v1546
    %1563 = vst [vmem:[#allocation18 + $0x38] sm:$0xff] %v1547
    %1564 = vst [vmem:[#allocation18 + $0x40] sm:$0xff] %v1548
    %1565 = vst [vmem:[#allocation18 + $0x48] sm:$0xff] %v1549
    %1566 = vst [vmem:[#allocation18 + $0x50] sm:$0xff] %v1550
    %1567 = vst [vmem:[#allocation18 + $0x58] sm:$0xff] %v1551
    %1568 = vst [vmem:[#allocation18 + $0x60] sm:$0xff] %v1552
    %1569 = vst [vmem:[#allocation18 + $0x68] sm:$0xff] %v1553
    %1570 = vst [vmem:[#allocation18 + $0x70] sm:$0xff] %v1554
    %1571 = vst [vmem:[#allocation18 + $0x78] sm:$0xf] %v1555
    %v1572 = vld [vmem:[#allocation13] sm:$0xff]
    %v1573 = vld [vmem:[#allocation13 + $0x8] sm:$0xff]
    %v1574 = vld [vmem:[#allocation13 + $0x10] sm:$0xff]
    %v1575 = vld [vmem:[#allocation13 + $0x18] sm:$0xff]
    %v1576 = vld [vmem:[#allocation13 + $0x20] sm:$0xff]
    %v1577 = vld [vmem:[#allocation13 + $0x28] sm:$0xff]
    %v1578 = vld [vmem:[#allocation13 + $0x30] sm:$0xff]
    %v1579 = vld [vmem:[#allocation13 + $0x38] sm:$0xff]
    %v1580 = vld [vmem:[#allocation13 + $0x40] sm:$0xff]
    %v1581 = vld [vmem:[#allocation13 + $0x48] sm:$0xff]
    %v1582 = vld [vmem:[#allocation13 + $0x50] sm:$0xff]
    %v1583 = vld [vmem:[#allocation13 + $0x58] sm:$0xff]
    %v1584 = vld [vmem:[#allocation13 + $0x60] sm:$0xff]
    %v1585 = vld [vmem:[#allocation13 + $0x68] sm:$0xff]
    %v1586 = vld [vmem:[#allocation13 + $0x70] sm:$0xff]
    %v1587 = vld [vmem:[#allocation13 + $0x78] sm:$0xf]
    %1588 = vst [vmem:[#allocation19] sm:$0xff] %v1572
    %1589 = vst [vmem:[#allocation19 + $0x8] sm:$0xff] %v1573
    %1590 = vst [vmem:[#allocation19 + $0x10] sm:$0xff] %v1574
    %1591 = vst [vmem:[#allocation19 + $0x18] sm:$0xff] %v1575
    %1592 = vst [vmem:[#allocation19 + $0x20] sm:$0xff] %v1576
    %1593 = vst [vmem:[#allocation19 + $0x28] sm:$0xff] %v1577
    %1594 = vst [vmem:[#allocation19 + $0x30] sm:$0xff] %v1578
    %1595 = vst [vmem:[#allocation19 + $0x38] sm:$0xff] %v1579
    %1596 = vst [vmem:[#allocation19 + $0x40] sm:$0xff] %v1580
    %1597 = vst [vmem:[#allocation19 + $0x48] sm:$0xff] %v1581
    %1598 = vst [vmem:[#allocation19 + $0x50] sm:$0xff] %v1582
    %1599 = vst [vmem:[#allocation19 + $0x58] sm:$0xff] %v1583
    %1600 = vst [vmem:[#allocation19 + $0x60] sm:$0xff] %v1584
    %1601 = vst [vmem:[#allocation19 + $0x68] sm:$0xff] %v1585
    %1602 = vst [vmem:[#allocation19 + $0x70] sm:$0xff] %v1586
    %1603 = vst [vmem:[#allocation19 + $0x78] sm:$0xf] %v1587
    %s1604 = sld [smem:[#allocation3]]
    %s1605 = sld [smem:[#allocation3 + $0x80]]
    %p1606 = scmp.lt.s32.totalorder %s1604, 124
    // Predicated region
    $region58: #{tpu_custom_call.1} parent=1 // pred_check
      %p1607 = pneg %p1606
    $region59: #{tpu_custom_call.1} parent=1 // pred_check_branch
      %1609 = sbr.rel (%p1607) target = $region61
    $region60: #{tpu_custom_call.1} parent=1 // pred_region
      %s1610 = scalar_lea.vmem [#allocation18], %s1604
      %1611 = vst [vmem:[%s1610] sm:$0x1] %v1539
    $region61: #{tpu_custom_call.1} parent=1 // pred_fallthru
      _
    %p1612 = scmp.lt.s32.totalorder %s1605, 124
    // Predicated region
    $region62: #{tpu_custom_call.1} parent=1 // pred_check
      %p1613 = pneg %p1612
    $region63: #{tpu_custom_call.1} parent=1 // pred_check_branch
      %1615 = sbr.rel (%p1613) target = $region65
    $region64: #{tpu_custom_call.1} parent=1 // pred_region
      %s1616 = scalar_lea.vmem [#allocation19], %s1605
      %1617 = vst [vmem:[%s1616] sm:$0x1] %v1539
    $region65: #{tpu_custom_call.1} parent=1 // pred_fallthru
      _
    %s1618 = sld [smem:[#allocation3 + $0x1]]
    %s1619 = sld [smem:[#allocation3 + $0x81]]
    %p1620 = scmp.lt.s32.totalorder %s1618, 124
    // Predicated region
    $region66: #{tpu_custom_call.1} parent=1 // pred_check
      %p1621 = pneg %p1620
    $region67: #{tpu_custom_call.1} parent=1 // pred_check_branch
      %1623 = sbr.rel (%p1621) target = $region69
    $region68: #{tpu_custom_call.1} parent=1 // pred_region
      %s1624 = scalar_lea.vmem [#allocation18], %s1618
      %1625 = vst [vmem:[%s1624 - $0x1] sm:$0x2] %v1539
    $region69: #{tpu_custom_call.1} parent=1 // pred_fallthru
      _
    %p1626 = scmp.lt.s32.totalorder %s1619, 124
    // Predicated region
    $region70: #{tpu_custom_call.1} parent=1 // pred_check
      %p1627 = pneg %p1626
    $region71: #{tpu_custom_call.1} parent=1 // pred_check_branch
      %1629 = sbr.rel (%p1627) target = $region73
    $region72: #{tpu_custom_call.1} parent=1 // pred_region
      %s1630 = scalar_lea.vmem [#allocation19], %s1619
      %1631 = vst [vmem:[%s1630 - $0x1] sm:$0x2] %v1539
    $region73: #{tpu_custom_call.1} parent=1 // pred_fallthru
      _
    %s1632 = sld [smem:[#allocation3 + $0x2]]
    %s1633 = sld [smem:[#allocation3 + $0x82]]
    %p1634 = scmp.lt.s32.totalorder %s1632, 124
    // Predicated region
    $region74: #{tpu_custom_call.1} parent=1 // pred_check
      %p1635 = pneg %p1634
    $region75: #{tpu_custom_call.1} parent=1 // pred_check_branch
      %1637 = sbr.rel (%p1635) target = $region77
    $region76: #{tpu_custom_call.1} parent=1 // pred_region
      %s1638 = scalar_lea.vmem [#allocation18], %s1632
      %1639 = vst [vmem:[%s1638 - $0x2] sm:$0x4] %v1539
    $region77: #{tpu_custom_call.1} parent=1 // pred_fallthru
      _
    %p1640 = scmp.lt.s32.totalorder %s1633, 124
    // Predicated region
    $region78: #{tpu_custom_call.1} parent=1 // pred_check
      %p1641 = pneg %p1640
    $region79: #{tpu_custom_call.1} parent=1 // pred_check_branch
      %1643 = sbr.rel (%p1641) target = $region81
    $region80: #{tpu_custom_call.1} parent=1 // pred_region
      %s1644 = scalar_lea.vmem [#allocation19], %s1633
      %1645 = vst [vmem:[%s1644 - $0x2] sm:$0x4] %v1539
    $region81: #{tpu_custom_call.1} parent=1 // pred_fallthru
      _
    %s1646 = sld [smem:[#allocation3 + $0x3]]
    %s1647 = sld [smem:[#allocation3 + $0x83]]
    %p1648 = scmp.lt.s32.totalorder %s1646, 124
    // Predicated region
    $region82: #{tpu_custom_call.1} parent=1 // pred_check
      %p1649 = pneg %p1648
    $region83: #{tpu_custom_call.1} parent=1 // pred_check_branch
      %1651 = sbr.rel (%p1649) target = $region85
    $region84: #{tpu_custom_call.1} parent=1 // pred_region
      %s1652 = scalar_lea.vmem [#allocation18], %s1646
      %1653 = vst [vmem:[%s1652 - $0x3] sm:$0x8] %v1539
    $region85: #{tpu_custom_call.1} parent=1 // pred_fallthru
      _
    %p1654 = scmp.lt.s32.totalorder %s1647, 124
    // Predicated region
    $region86: #{tpu_custom_call.1} parent=1 // pred_check
      %p1655 = pneg %p1654
    $region87: #{tpu_custom_call.1} parent=1 // pred_check_branch
      %1657 = sbr.rel (%p1655) target = $region89
    $region88: #{tpu_custom_call.1} parent=1 // pred_region
      %s1658 = scalar_lea.vmem [#allocation19], %s1647
      %1659 = vst [vmem:[%s1658 - $0x3] sm:$0x8] %v1539
    $region89: #{tpu_custom_call.1} parent=1 // pred_fallthru
      _
    %s1660 = sld [smem:[#allocation3 + $0x4]]
    %s1661 = sld [smem:[#allocation3 + $0x84]]
    %p1662 = scmp.lt.s32.totalorder %s1660, 124
    // Predicated region
    $region90: #{tpu_custom_call.1} parent=1 // pred_check
      %p1663 = pneg %p1662
    $region91: #{tpu_custom_call.1} parent=1 // pred_check_branch
      %1665 = sbr.rel (%p1663) target = $region93
    $region92: #{tpu_custom_call.1} parent=1 // pred_region
      %s1666 = scalar_lea.vmem [#allocation18], %s1660
      %1667 = vst [vmem:[%s1666 - $0x4] sm:$0x10] %v1539
    $region93: #{tpu_custom_call.1} parent=1 // pred_fallthru
      _
    %p1668 = scmp.lt.s32.totalorder %s1661, 124
    // Predicated region
    $region94: #{tpu_custom_call.1} parent=1 // pred_check
      %p1669 = pneg %p1668
    $region95: #{tpu_custom_call.1} parent=1 // pred_check_branch
      %1671 = sbr.rel (%p1669) target = $region97
    $region96: #{tpu_custom_call.1} parent=1 // pred_region
      %s1672 = scalar_lea.vmem [#allocation19], %s1661
      %1673 = vst [vmem:[%s1672 - $0x4] sm:$0x10] %v1539
    $region97: #{tpu_custom_call.1} parent=1 // pred_fallthru
      _
    %s1674 = sld [smem:[#allocation3 + $0x5]]
    %s1675 = sld [smem:[#allocation3 + $0x85]]
    %p1676 = scmp.lt.s32.totalorder %s1674, 124
    // Predicated region
    $region98: #{tpu_custom_call.1} parent=1 // pred_check
      %p1677 = pneg %p1676
    $region99: #{tpu_custom_call.1} parent=1 // pred_check_branch
      %1679 = sbr.rel (%p1677) target = $region101
    $region100: #{tpu_custom_call.1} parent=1 // pred_region
      %s1680 = scalar_lea.vmem [#allocation18], %s1674
      %1681 = vst [vmem:[%s1680 - $0x5] sm:$0x20] %v1539
    $region101: #{tpu_custom_call.1} parent=1 // pred_fallthru
      _
    %p1682 = scmp.lt.s32.totalorder %s1675, 124
    // Predicated region
    $region102: #{tpu_custom_call.1} parent=1 // pred_check
      %p1683 = pneg %p1682
    $region103: #{tpu_custom_call.1} parent=1 // pred_check_branch
      %1685 = sbr.rel (%p1683) target = $region105
    $region104: #{tpu_custom_call.1} parent=1 // pred_region
      %s1686 = scalar_lea.vmem [#allocation19], %s1675
      %1687 = vst [vmem:[%s1686 - $0x5] sm:$0x20] %v1539
    $region105: #{tpu_custom_call.1} parent=1 // pred_fallthru
      _
    %s1688 = sld [smem:[#allocation3 + $0x6]]
    %s1689 = sld [smem:[#allocation3 + $0x86]]
    %p1690 = scmp.lt.s32.totalorder %s1688, 124
    // Predicated region
    $region106: #{tpu_custom_call.1} parent=1 // pred_check
      %p1691 = pneg %p1690
    $region107: #{tpu_custom_call.1} parent=1 // pred_check_branch
      %1693 = sbr.rel (%p1691) target = $region109
    $region108: #{tpu_custom_call.1} parent=1 // pred_region
      %s1694 = scalar_lea.vmem [#allocation18], %s1688
      %1695 = vst [vmem:[%s1694 - $0x6] sm:$0x40] %v1539
    $region109: #{tpu_custom_call.1} parent=1 // pred_fallthru
      _
    %p1696 = scmp.lt.s32.totalorder %s1689, 124
    // Predicated region
    $region110: #{tpu_custom_call.1} parent=1 // pred_check
      %p1697 = pneg %p1696
    $region111: #{tpu_custom_call.1} parent=1 // pred_check_branch
      %1699 = sbr.rel (%p1697) target = $region113
    $region112: #{tpu_custom_call.1} parent=1 // pred_region
      %s1700 = scalar_lea.vmem [#allocation19], %s1689
      %1701 = vst [vmem:[%s1700 - $0x6] sm:$0x40] %v1539
    $region113: #{tpu_custom_call.1} parent=1 // pred_fallthru
      _
    %s1702 = sld [smem:[#allocation3 + $0x7]]
    %s1703 = sld [smem:[#allocation3 + $0x87]]
    %p1704 = scmp.lt.s32.totalorder %s1702, 124
    // Predicated region
    $region114: #{tpu_custom_call.1} parent=1 // pred_check
      %p1705 = pneg %p1704
    $region115: #{tpu_custom_call.1} parent=1 // pred_check_branch
      %1707 = sbr.rel (%p1705) target = $region117
    $region116: #{tpu_custom_call.1} parent=1 // pred_region
      %s1708 = scalar_lea.vmem [#allocation18], %s1702
      %1709 = vst [vmem:[%s1708 - $0x7] sm:$0x80] %v1539
    $region117: #{tpu_custom_call.1} parent=1 // pred_fallthru
      _
    %p1710 = scmp.lt.s32.totalorder %s1703, 124
    // Predicated region
    $region118: #{tpu_custom_call.1} parent=1 // pred_check
      %p1711 = pneg %p1710
    $region119: #{tpu_custom_call.1} parent=1 // pred_check_branch
      %1713 = sbr.rel (%p1711) target = $region121
    $region120: #{tpu_custom_call.1} parent=1 // pred_region
      %s1714 = scalar_lea.vmem [#allocation19], %s1703
      %1715 = vst [vmem:[%s1714 - $0x7] sm:$0x80] %v1539
    $region121: #{tpu_custom_call.1} parent=1 // pred_fallthru
      _
    %1716 = vst [vmem:[#allocation21] sm:$0xff] %v1224
    %v1717 = vld [vmem:[#allocation18] sm:$0xff]
    %v1718 = vld [vmem:[#allocation18 + $0x8] sm:$0xff]
    %v1719 = vld [vmem:[#allocation18 + $0x10] sm:$0xff]
    %v1720 = vld [vmem:[#allocation18 + $0x18] sm:$0xff]
    %v1721 = vld [vmem:[#allocation18 + $0x20] sm:$0xff]
    %v1722 = vld [vmem:[#allocation18 + $0x28] sm:$0xff]
    %v1723 = vld [vmem:[#allocation18 + $0x30] sm:$0xff]
    %v1724 = vld [vmem:[#allocation18 + $0x38] sm:$0xff]
    %v1725 = vld [vmem:[#allocation18 + $0x40] sm:$0xff]
    %v1726 = vld [vmem:[#allocation18 + $0x48] sm:$0xff]
    %v1727 = vld [vmem:[#allocation18 + $0x50] sm:$0xff]
    %v1728 = vld [vmem:[#allocation18 + $0x58] sm:$0xff]
    %v1729 = vld [vmem:[#allocation18 + $0x60] sm:$0xff]
    %v1730 = vld [vmem:[#allocation18 + $0x68] sm:$0xff]
    %v1731 = vld [vmem:[#allocation18 + $0x70] sm:$0xff]
    %v1732 = vld [vmem:[#allocation18 + $0x78] sm:$0xf]
    %1733 = vst [vmem:[#allocation21 + $0x8] sm:$0xff] %v1717
    %1734 = vst [vmem:[#allocation21 + $0x10] sm:$0xff] %v1718
    %1735 = vst [vmem:[#allocation21 + $0x18] sm:$0xff] %v1719
    %1736 = vst [vmem:[#allocation21 + $0x20] sm:$0xff] %v1720
    %1737 = vst [vmem:[#allocation21 + $0x28] sm:$0xff] %v1721
    %1738 = vst [vmem:[#allocation21 + $0x30] sm:$0xff] %v1722
    %1739 = vst [vmem:[#allocation21 + $0x38] sm:$0xff] %v1723
    %1740 = vst [vmem:[#allocation21 + $0x40] sm:$0xff] %v1724
    %1741 = vst [vmem:[#allocation21 + $0x48] sm:$0xff] %v1725
    %1742 = vst [vmem:[#allocation21 + $0x50] sm:$0xff] %v1726
    %1743 = vst [vmem:[#allocation21 + $0x58] sm:$0xff] %v1727
    %1744 = vst [vmem:[#allocation21 + $0x60] sm:$0xff] %v1728
    %1745 = vst [vmem:[#allocation21 + $0x68] sm:$0xff] %v1729
    %1746 = vst [vmem:[#allocation21 + $0x70] sm:$0xff] %v1730
    %1747 = vst [vmem:[#allocation21 + $0x78] sm:$0xff] %v1731
    %1748 = vst [vmem:[#allocation21 + $0x80] sm:$0xf] %v1732
    %v1749 = vld [vmem:[#allocation19] sm:$0xff]
    %v1750 = vld [vmem:[#allocation19 + $0x8] sm:$0xff]
    %v1751 = vld [vmem:[#allocation19 + $0x10] sm:$0xff]
    %v1752 = vld [vmem:[#allocation19 + $0x18] sm:$0xff]
    %v1753 = vld [vmem:[#allocation19 + $0x20] sm:$0xff]
    %v1754 = vld [vmem:[#allocation19 + $0x28] sm:$0xff]
    %v1755 = vld [vmem:[#allocation19 + $0x30] sm:$0xff]
    %v1756 = vld [vmem:[#allocation19 + $0x38] sm:$0xff]
    %v1757 = vld [vmem:[#allocation19 + $0x40] sm:$0xff]
    %v1758 = vld [vmem:[#allocation19 + $0x48] sm:$0xff]
    %v1759 = vld [vmem:[#allocation19 + $0x50] sm:$0xff]
    %v1760 = vld [vmem:[#allocation19 + $0x58] sm:$0xff]
    %v1761 = vld [vmem:[#allocation19 + $0x60] sm:$0xff]
    %v1762 = vld [vmem:[#allocation19 + $0x68] sm:$0xff]
    %v1763 = vld [vmem:[#allocation19 + $0x70] sm:$0xff]
    %v1764 = vld [vmem:[#allocation19 + $0x78] sm:$0xf]
    %1765 = vst [vmem:[#allocation21 + $0x84] sm:$0xff] %v1749
    %1766 = vst [vmem:[#allocation21 + $0x8c] sm:$0xff] %v1750
    %1767 = vst [vmem:[#allocation21 + $0x94] sm:$0xff] %v1751
    %1768 = vst [vmem:[#allocation21 + $0x9c] sm:$0xff] %v1752
    %1769 = vst [vmem:[#allocation21 + $0xa4] sm:$0xff] %v1753
    %1770 = vst [vmem:[#allocation21 + $0xac] sm:$0xff] %v1754
    %1771 = vst [vmem:[#allocation21 + $0xb4] sm:$0xff] %v1755
    %1772 = vst [vmem:[#allocation21 + $0xbc] sm:$0xff] %v1756
    %1773 = vst [vmem:[#allocation21 + $0xc4] sm:$0xff] %v1757
    %1774 = vst [vmem:[#allocation21 + $0xcc] sm:$0xff] %v1758
    %1775 = vst [vmem:[#allocation21 + $0xd4] sm:$0xff] %v1759
    %1776 = vst [vmem:[#allocation21 + $0xdc] sm:$0xff] %v1760
    %1777 = vst [vmem:[#allocation21 + $0xe4] sm:$0xff] %v1761
    %1778 = vst [vmem:[#allocation21 + $0xec] sm:$0xff] %v1762
    %1779 = vst [vmem:[#allocation21 + $0xf4] sm:$0xff] %v1763
    %1780 = vst [vmem:[#allocation21 + $0xfc] sm:$0xf] %v1764
    // Predicated region
    $region122: #{tpu_custom_call.1} parent=1 // pred_check
      _
    $region123: #{tpu_custom_call.1} parent=1 // pred_check_branch
      %1782 = sbr.rel (0) target = $region125
    $region124: #{tpu_custom_call.1} parent=1 // pred_region
      %1784 = vsyncadd [#allocation6], 0
      %s1785 = sshll.u32 [#allocation15], 4
      %s1786 = int_to_ptr.vmem [resolvable:$true] %s1785
      %s1787 = sshll.u32 %s9, 4
      %s1788 = int_to_ptr.hbm [resolvable:$true] %s1787
      %1793 = dma.vmem_to_hbm [thread:$0]  %s1786, 16384, %s1788, [#allocation6], 128, 128, 8
    $region125: #{tpu_custom_call.1} parent=1 // pred_fallthru
      _
    // Predicated region
    $region126: #{tpu_custom_call.1} parent=1 // pred_check
      _
    $region127: #{tpu_custom_call.1} parent=1 // pred_check_branch
      %1795 = sbr.rel (0) target = $region129
    $region128: #{tpu_custom_call.1} parent=1 // pred_region
      %1797 = vsyncadd [#allocation17], 0
      %s1799 = sshll.u32 [#allocation16], 4
      %s1800 = int_to_ptr.vmem [resolvable:$true] %s1799
      %s1801 = sshll.u32 %s10, 4
      %s1802 = int_to_ptr.hbm [resolvable:$true] %s1801
      %1804 = dma.vmem_to_hbm [thread:$0]  %s1800, 16, %s1802, [#allocation17]
    $region129: #{tpu_custom_call.1} parent=1 // pred_fallthru
      _
    // Predicated region
    $region130: #{tpu_custom_call.1} parent=1 // pred_check
      _
    $region131: #{tpu_custom_call.1} parent=1 // pred_check_branch
      %1806 = sbr.rel (0) target = $region133
    $region132: #{tpu_custom_call.1} parent=1 // pred_region
      %1808 = vsyncadd [#allocation17], 0
      %s1809 = sshll.u32 [#allocation18], 4
      %s1810 = int_to_ptr.vmem [resolvable:$true] %s1809
      %s1811 = sshll.u32 %s11, 4
      %s1812 = int_to_ptr.hbm [resolvable:$true] %s1811
      %1817 = dma.vmem_to_hbm [thread:$0]  %s1810, 2048, %s1812, [#allocation17], 128, 128, 8
    $region133: #{tpu_custom_call.1} parent=1 // pred_fallthru
      _
    // Predicated region
    $region134: #{tpu_custom_call.1} parent=1 // pred_check
      _
    $region135: #{tpu_custom_call.1} parent=1 // pred_check_branch
      %1819 = sbr.rel (0) target = $region137
    $region136: #{tpu_custom_call.1} parent=1 // pred_region
      %1821 = vsyncadd [#allocation20], 0
      %s1822 = sshll.u32 [#allocation19], 4
      %s1823 = int_to_ptr.vmem [resolvable:$true] %s1822
      %s1824 = sshll.u32 %s12, 4
      %s1825 = int_to_ptr.hbm [resolvable:$true] %s1824
      %1830 = dma.vmem_to_hbm [thread:$0]  %s1823, 2048, %s1825, [#allocation20], 128, 128, 8
    $region137: #{tpu_custom_call.1} parent=1 // pred_fallthru
      _
    // Predicated region
    $region138: #{tpu_custom_call.1} parent=1 // pred_check
      _
    $region139: #{tpu_custom_call.1} parent=1 // pred_check_branch
      %1832 = sbr.rel (0) target = $region141
    $region140: #{tpu_custom_call.1} parent=1 // pred_region
      %1834 = vsyncadd [#allocation20], 0
      %s1835 = sshll.u32 [#allocation21], 4
      %s1836 = int_to_ptr.vmem [resolvable:$true] %s1835
      %s1837 = sshll.u32 %s13, 4
      %s1838 = int_to_ptr.hbm [resolvable:$true] %s1837
      %1843 = dma.vmem_to_hbm [thread:$0]  %s1836, 4096, %s1838, [#allocation20], 128, 128, 8
    $region141: #{tpu_custom_call.1} parent=1 // pred_fallthru
      _
    // Predicated region
    $region142: #{tpu_custom_call.1} parent=1 // pred_check
      _
    $region143: #{tpu_custom_call.1} parent=1 // pred_check_branch
      %1845 = sbr.rel (0) target = $region145
    $region144: #{tpu_custom_call.1} parent=1 // pred_region
      %1847 = dma.done [#allocation6], 16384
    $region145: #{tpu_custom_call.1} parent=1 // pred_fallthru
      _
    // Predicated region
    $region146: #{tpu_custom_call.1} parent=1 // pred_check
      _
    $region147: #{tpu_custom_call.1} parent=1 // pred_check_branch
      %1849 = sbr.rel (0) target = $region149
    $region148: #{tpu_custom_call.1} parent=1 // pred_region
      %1851 = dma.done [#allocation17], 16
    $region149: #{tpu_custom_call.1} parent=1 // pred_fallthru
      _
    // Predicated region
    $region150: #{tpu_custom_call.1} parent=1 // pred_check
      _
    $region151: #{tpu_custom_call.1} parent=1 // pred_check_branch
      %1853 = sbr.rel (0) target = $region153
    $region152: #{tpu_custom_call.1} parent=1 // pred_region
      %1855 = dma.done [#allocation17], 2048
    $region153: #{tpu_custom_call.1} parent=1 // pred_fallthru
      _
    // Predicated region
    $region154: #{tpu_custom_call.1} parent=1 // pred_check
      _
    $region155: #{tpu_custom_call.1} parent=1 // pred_check_branch
      %1857 = sbr.rel (0) target = $region157
    $region156: #{tpu_custom_call.1} parent=1 // pred_region
      %1859 = dma.done [#allocation20], 2048
    $region157: #{tpu_custom_call.1} parent=1 // pred_fallthru
      _
    // Predicated region
    $region158: #{tpu_custom_call.1} parent=1 // pred_check
      _
    $region159: #{tpu_custom_call.1} parent=1 // pred_check_branch
      %1861 = sbr.rel (0) target = $region161
    $region160: #{tpu_custom_call.1} parent=1 // pred_region
      %1863 = dma.done [#allocation20], 4096
    $region161: #{tpu_custom_call.1} parent=1 // pred_fallthru
      _
    %1864 = vsyncpa [#allocation5], 1
    %1865 = vsyncpa [#allocation8], 1
    %1866 = vsyncpa [#allocation11], 1
    %1867 = vsyncpa [#allocation14], 1
    %1868 = vsyncpa [#allocation6], 1
    %1869 = vsyncpa [#allocation17], 1
    %1870 = vsyncpa [#allocation20], 1

</llo_original>
